<compile_context>
chip_gen: v5e
topology: v5e:2x2
jax: 0.10.0
libtpu: 0.0.40
codegen_flags: <defaults>
</compile_context>

<pallas_src>
import math
import jax
import jax.numpy as jnp
from jax.experimental import pallas as pl
from jax.experimental.pallas import tpu as pltpu

# ---- model hyperparameters (mirrors the PyTorch script) ----
block_size = 8
embedding_dim = 32
vocab = sorted(set('hello world'))          # [' ', 'd', 'e', 'h', 'l', 'o', 'r', 'w']
vocab_size = len(vocab)                     # 8
char_to_idx = {ch: idx for idx, ch in enumerate(vocab)}
LN_EPS = 1e-5
LANE = 128

# rows (tokens) processed per grid step: 16 sequences x 8 tokens = 128 rows -> full MXU fill
ROWS_PER_BLOCK = 128

# packed weight-slab lane offsets (each section 128-lane aligned, 32 contraction rows)
SEC_EMB = 0 * LANE    # combined token+position embedding table, lanes [0, D)
SEC_QKV = 1 * LANE    # fused (Wq*scale | Wk | Wv), lanes [128, 128 + 3D)
SEC_WO = 2 * LANE     # attention out_proj
SEC_WF1 = 3 * LANE    # feed-forward 1
SEC_WF2 = 4 * LANE    # feed-forward 2
SEC_WOUT = 5 * LANE   # vocab head, zero-padded to a full 128 lanes (lane-dense output)
N_SEC = 6

# bias / LN-param slab row indices
ROW_BQKV, ROW_BO, ROW_G1, ROW_BE1, ROW_BF1, ROW_BF2, ROW_G2, ROW_BE2, ROW_BOUT = range(9)


def _layernorm(h, gamma, beta):
    # single-pass stats: E[x], E[x^2] (one cross-lane reduction chain instead of two)
    mu = jnp.mean(h, axis=-1, keepdims=True)
    mu2 = jnp.mean(h * h, axis=-1, keepdims=True)
    var = mu2 - mu * mu
    return (h - mu) * jax.lax.rsqrt(var + LN_EPS) * gamma + beta


def minigpt_kernel(onehot_ref, w_ref, b_ref, mask_ref, out_ref):
    D = embedding_dim

    # ---- embedding lookup: (rows, D) token|position one-hot (built in wrapper) @ packed table ----
    emb_tbl = w_ref[:, SEC_EMB:SEC_EMB + D]                               # (D, D)
    x = jnp.dot(onehot_ref[...], emb_tbl, preferred_element_type=jnp.float32)   # (TM, D)

    # ---- fused QKV projection (1/sqrt(D) folded into Wq / bq at pack time) ----
    w_qkv = w_ref[:, SEC_QKV:SEC_QKV + 3 * D]                             # (D, 3D)
    qkv = jnp.dot(x, w_qkv, preferred_element_type=jnp.float32) \
        + b_ref[ROW_BQKV:ROW_BQKV + 1, 0:3 * D]                           # (TM, 3D)
    q = qkv[:, 0:D]
    k = qkv[:, D:2 * D]
    v = qkv[:, 2 * D:3 * D]

    # ---- within-block attention: one dense matmul + precomputed block-diag additive mask ----
    scores = jax.lax.dot_general(q, k, (((1,), (1,)), ((), ())),
                                 preferred_element_type=jnp.float32) + mask_ref[...]   # (TM, TM)
    m = jnp.max(scores, axis=-1, keepdims=True)
    p = jnp.exp(scores - m)
    attn = p * pl.reciprocal(jnp.sum(p, axis=-1, keepdims=True), approx=True)
    ctx = jnp.dot(attn, v, preferred_element_type=jnp.float32)            # (TM, D)

    w_o = w_ref[:, SEC_WO:SEC_WO + D]
    attn_out = jnp.dot(ctx, w_o, preferred_element_type=jnp.float32) \
        + b_ref[ROW_BO:ROW_BO + 1, 0:D]

    # ---- residual + LayerNorm 1 ----
    h = _layernorm(x + attn_out,
                   b_ref[ROW_G1:ROW_G1 + 1, 0:D], b_ref[ROW_BE1:ROW_BE1 + 1, 0:D])

    # ---- feed-forward (Linear -> ReLU -> Linear) ----
    w_f1 = w_ref[:, SEC_WF1:SEC_WF1 + D]
    w_f2 = w_ref[:, SEC_WF2:SEC_WF2 + D]
    ff = jnp.maximum(jnp.dot(h, w_f1, preferred_element_type=jnp.float32)
                     + b_ref[ROW_BF1:ROW_BF1 + 1, 0:D], 0.0)
    ff = jnp.dot(ff, w_f2, preferred_element_type=jnp.float32) \
        + b_ref[ROW_BF2:ROW_BF2 + 1, 0:D]

    # ---- residual + LayerNorm 2 ----
    h2 = _layernorm(h + ff,
                    b_ref[ROW_G2:ROW_G2 + 1, 0:D], b_ref[ROW_BE2:ROW_BE2 + 1, 0:D])

    # ---- lane-dense vocab head: (TM, 128) padded logits, single unmasked vst ----
    w_out = w_ref[:, SEC_WOUT:SEC_WOUT + LANE]                            # (D, 128)
    out_ref[...] = jnp.dot(h2, w_out, preferred_element_type=jnp.float32) \
        + b_ref[ROW_BOUT:ROW_BOUT + 1, :]


def init_params(key):
    D, V = embedding_dim, vocab_size
    ks = jax.random.split(key, 10)
    p = {}
    p['tok_emb'] = jax.random.normal(ks[0], (V, D), jnp.float32) * 0.02
    p['pos_emb'] = jax.random.normal(ks[1], (2 * block_size, D), jnp.float32) * 0.02
    # MultiheadAttention in_proj (q/k/v) + out_proj   (PyTorch convention: (out, in))
    p['wq'] = jax.random.normal(ks[2], (D, D), jnp.float32) * 0.02
    p['wk'] = jax.random.normal(ks[3], (D, D), jnp.float32) * 0.02
    p['wv'] = jax.random.normal(ks[4], (D, D), jnp.float32) * 0.02
    p['bq'] = jnp.zeros((D,), jnp.float32)
    p['bk'] = jnp.zeros((D,), jnp.float32)
    p['bv'] = jnp.zeros((D,), jnp.float32)
    p['wo'] = jax.random.normal(ks[5], (D, D), jnp.float32) * 0.02
    p['bo'] = jnp.zeros((D,), jnp.float32)
    p['g1'] = jnp.ones((D,), jnp.float32)
    p['be1'] = jnp.zeros((D,), jnp.float32)
    p['wf1'] = jax.random.normal(ks[6], (D, D), jnp.float32) * 0.02
    p['bf1'] = jnp.zeros((D,), jnp.float32)
    p['wf2'] = jax.random.normal(ks[7], (D, D), jnp.float32) * 0.02
    p['bf2'] = jnp.zeros((D,), jnp.float32)
    p['g2'] = jnp.ones((D,), jnp.float32)
    p['be2'] = jnp.zeros((D,), jnp.float32)
    p['wout'] = jax.random.normal(ks[8], (V, D), jnp.float32) * 0.02
    p['bout'] = jnp.zeros((V,), jnp.float32)
    return p


def pack_params(p):
    """One-time packing: weights pre-transposed to (in, out), 128-lane-aligned sections;
    biases / LN params packed into a single (16, 128) slab; attention 1/sqrt(D) scale folded in."""
    D, V, P = embedding_dim, vocab_size, 2 * block_size
    assert V + P <= D, "combined embedding table must fit in the contraction dim"
    scale = 1.0 / math.sqrt(D)

    w = jnp.zeros((D, N_SEC * LANE), jnp.float32)
    # combined embedding table: rows [0,V) = token emb, rows [V, V+P) = position emb
    w = w.at[0:V, SEC_EMB:SEC_EMB + D].set(p['tok_emb'])
    w = w.at[V:V + P, SEC_EMB:SEC_EMB + D].set(p['pos_emb'])
    w = w.at[:, SEC_QKV:SEC_QKV + D].set((p['wq'] * scale).T)
    w = w.at[:, SEC_QKV + D:SEC_QKV + 2 * D].set(p['wk'].T)
    w = w.at[:, SEC_QKV + 2 * D:SEC_QKV + 3 * D].set(p['wv'].T)
    w = w.at[:, SEC_WO:SEC_WO + D].set(p['wo'].T)
    w = w.at[:, SEC_WF1:SEC_WF1 + D].set(p['wf1'].T)
    w = w.at[:, SEC_WF2:SEC_WF2 + D].set(p['wf2'].T)
    w = w.at[:, SEC_WOUT:SEC_WOUT + V].set(p['wout'].T)    # lanes V..127 stay zero

    b = jnp.zeros((16, LANE), jnp.float32)
    b = b.at[ROW_BQKV, 0:D].set(p['bq'] * scale)
    b = b.at[ROW_BQKV, D:2 * D].set(p['bk'])
    b = b.at[ROW_BQKV, 2 * D:3 * D].set(p['bv'])
    b = b.at[ROW_BO, 0:D].set(p['bo'])
    b = b.at[ROW_G1, 0:D].set(p['g1'])
    b = b.at[ROW_BE1, 0:D].set(p['be1'])
    b = b.at[ROW_BF1, 0:D].set(p['bf1'])
    b = b.at[ROW_BF2, 0:D].set(p['bf2'])
    b = b.at[ROW_G2, 0:D].set(p['g2'])
    b = b.at[ROW_BE2, 0:D].set(p['be2'])
    b = b.at[ROW_BOUT, 0:V].set(p['bout'])
    return w, b


def minigpt_forward(token_ids, packed):
    """token_ids: (B, S) int32 -> logits (B, S, vocab_size) float32."""
    B, S = token_ids.shape
    D, V = embedding_dim, vocab_size
    assert V + S <= D, "combined one-hot width must fit in the embedding dim"
    w_slab, b_slab = packed

    seqs_per_block = max(1, ROWS_PER_BLOCK // S)
    tm = seqs_per_block * S                       # rows per grid step (128 for S=8)
    assert tm % 8 == 0

    # pad batch up to a whole number of row blocks (padded sequences are discarded on output)
    pad_b = (-B) % seqs_per_block
    if pad_b:
        token_ids = jnp.concatenate(
            [token_ids, jnp.zeros((pad_b, S), token_ids.dtype)], axis=0)
    bp = B + pad_b
    rows = bp * S
    n_blocks = rows // tm

    # (rows, D) combined token+position one-hot built in the wrapper: avoids a (N, 1) VMEM
    # operand and the in-kernel lane broadcast/relayout a compare against it would need.
    ids = token_ids.reshape(rows).astype(jnp.int32)
    pos = jnp.tile(jnp.arange(S, dtype=jnp.int32), bp)
    col = jnp.arange(D, dtype=jnp.int32)[None, :]
    onehot = ((col == ids[:, None]) | (col == (pos[:, None] + V))).astype(jnp.float32)

    # precomputed additive block-diagonal mask (identical for every row block -> passed once,
    # constant index_map keeps it VMEM-resident across the grid)
    seq_of_row = jnp.arange(tm, dtype=jnp.int32) // S
    attn_mask = jnp.where(seq_of_row[:, None] == seq_of_row[None, :],
                          0.0, -1e30).astype(jnp.float32)

    # rough advisory cost so XLA schedules surrounding ops sensibly
    flops = n_blocks * (2 * tm * D * (D + 3 * D + D + D + D + LANE) + 4 * tm * tm * D)
    bytes_accessed = (onehot.size + w_slab.size + b_slab.size
                      + attn_mask.size + rows * LANE) * 4

    out = pl.pallas_call(
        minigpt_kernel,
        out_shape=jax.ShapeDtypeStruct((rows, LANE), jnp.float32),
        grid_spec=pltpu.PrefetchScalarGridSpec(
            num_scalar_prefetch=0,
            grid=(n_blocks,),
            in_specs=[
                pl.BlockSpec((tm, D), lambda i: (i, 0)),            # activations: streamed
                pl.BlockSpec((D, N_SEC * LANE), lambda i: (0, 0)),   # weight slab: resident
                pl.BlockSpec((16, LANE), lambda i: (0, 0)),          # bias / LN slab: resident
                pl.BlockSpec((tm, tm), lambda i: (0, 0)),            # additive attn mask: resident
            ],
            out_specs=pl.BlockSpec((tm, LANE), lambda i: (i, 0)),    # lane-dense logits
        ),
        compiler_params=pltpu.CompilerParams(
            dimension_semantics=("parallel",)),                      # v7x megacore split; no-op v5e/v6e
        cost_estimate=pl.CostEstimate(
            flops=int(flops),
            transcendentals=int(n_blocks * (tm * tm + 3 * tm)),
            bytes_accessed=int(bytes_accessed)),
    )(onehot, w_slab, b_slab, attn_mask)

    # wrapper-side layout plumbing: drop batch padding + lane padding, restore (B, S, V)
    return out[:B * S, :V].reshape(B, S, V)


# ---- pure-JAX reference (mirrors the PyTorch forward) for correctness checking ----
def _layernorm_ref(h, gamma, beta):
    mu = jnp.mean(h, axis=-1, keepdims=True)
    var = jnp.mean((h - mu) ** 2, axis=-1, keepdims=True)
    return (h - mu) * jax.lax.rsqrt(var + LN_EPS) * gamma + beta


def minigpt_reference(token_ids, p):
    _, S = token_ids.shape
    scale = 1.0 / math.sqrt(embedding_dim)
    x = p['tok_emb'][token_ids] + p['pos_emb'][jnp.arange(S)][None, :, :]
    q = x @ p['wq'].T + p['bq']
    k = x @ p['wk'].T + p['bk']
    v = x @ p['wv'].T + p['bv']
    scores = jnp.einsum('bqd,bkd->bqk', q * scale, k)
    attn = jax.nn.softmax(scores, axis=-1)
    ctx = jnp.einsum('bqk,bkd->bqd', attn, v)
    attn_out = ctx @ p['wo'].T + p['bo']
    h = _layernorm_ref(x + attn_out, p['g1'], p['be1'])
    ff = jnp.maximum(h @ p['wf1'].T + p['bf1'], 0.0) @ p['wf2'].T + p['bf2']
    h2 = _layernorm_ref(h + ff, p['g2'], p['be2'])
    return h2 @ p['wout'].T + p['bout']


if __name__ == "__main__":
    key = jax.random.PRNGKey(0)
    params = init_params(key)
    packed = pack_params(params)

    # small deterministic batch from the corpus, like the PyTorch script: (2, 8) int32
    corpus = 'hello world'
    encoded = [char_to_idx[ch] for ch in corpus]              # len 11
    seq_a = encoded[:block_size]                              # len 8
    seq_b = encoded[1:1 + block_size]                         # len 8
    token_ids = jnp.array([seq_a, seq_b], dtype=jnp.int32)    # (2, 8)

    logits = minigpt_forward(token_ids, packed)
    jax.block_until_ready(logits)
    assert logits.shape == (2, block_size, vocab_size)
    ref = minigpt_reference(token_ids, params)
    assert jnp.allclose(logits, ref, atol=2e-3, rtol=2e-2)

    # exercise the multi-block grid path (64 sequences -> 4 row blocks of 128 rows)
    big_ids = jax.random.randint(jax.random.PRNGKey(1), (64, block_size),
                                 0, vocab_size, dtype=jnp.int32)
    big_logits = minigpt_forward(big_ids, packed)
    jax.block_until_ready(big_logits)
    assert big_logits.shape == (64, block_size, vocab_size)
    big_ref = minigpt_reference(big_ids, params)
    assert jnp.allclose(big_logits, big_ref, atol=2e-3, rtol=2e-2)

    print("KERNEL_OK")
</pallas_src>

<mosaic_0001>
module attributes {stable_mosaic.version = 11 : i64} {
  func.func @minigpt_kernel(%arg0: i32, %arg1: memref<128x32xf32, #tpu.memory_space<vmem>>, %arg2: memref<32x768xf32, #tpu.memory_space<vmem>>, %arg3: memref<16x128xf32, #tpu.memory_space<vmem>>, %arg4: memref<128x128xf32, #tpu.memory_space<vmem>>, %arg5: memref<128x128xf32, #tpu.memory_space<vmem>>) attributes {dimension_semantics = [#tpu.dimension_semantics<parallel>], iteration_bounds = array<i64: 1>, scalar_prefetch = 0 : i64, scratch_operands = 0 : i64, tpu.core_type = #tpu.core_type<tc>, window_params = [{transform_indices = @transform_0, window_bounds = array<i64: 128, 32>}, {pipeline_mode = #tpu.pipeline_mode<synchronous>, transform_indices = @transform_1, window_bounds = array<i64: 32, 768>}, {pipeline_mode = #tpu.pipeline_mode<synchronous>, transform_indices = @transform_2, window_bounds = array<i64: 16, 128>}, {pipeline_mode = #tpu.pipeline_mode<synchronous>, transform_indices = @transform_3, window_bounds = array<i64: 128, 128>}, {transform_indices = @transform_4, window_bounds = array<i64: 128, 128>}]} {
    %c0 = arith.constant 0 : index
    %c0_0 = arith.constant 0 : index
    %0 = vector.load %arg2[%c0, %c0_0] : memref<32x768xf32, #tpu.memory_space<vmem>>, vector<32x32xf32>
    %c0_1 = arith.constant 0 : index
    %c0_2 = arith.constant 0 : index
    %1 = vector.load %arg1[%c0_1, %c0_2] : memref<128x32xf32, #tpu.memory_space<vmem>>, vector<128x32xf32>
    %cst = arith.constant dense<0.000000e+00> : vector<128x32xf32>
    %2 = tpu.matmul %1, %0, %cst {dimension_numbers = #tpu.dot_dimension_numbers<[1], [0], [0], [1], [0, 0, 1, 1], [], []>} : vector<128x32xf32>, vector<32x32xf32>, vector<128x32xf32> -> vector<128x32xf32>
    %c0_3 = arith.constant 0 : index
    %c128 = arith.constant 128 : index
    %3 = vector.load %arg2[%c0_3, %c128] : memref<32x768xf32, #tpu.memory_space<vmem>>, vector<32x96xf32>
    %cst_4 = arith.constant dense<0.000000e+00> : vector<128x96xf32>
    %4 = tpu.matmul %2, %3, %cst_4 {dimension_numbers = #tpu.dot_dimension_numbers<[1], [0], [0], [1], [0, 0, 1, 1], [], []>} : vector<128x32xf32>, vector<32x96xf32>, vector<128x96xf32> -> vector<128x96xf32>
    %c0_5 = arith.constant 0 : index
    %c0_6 = arith.constant 0 : index
    %5 = vector.load %arg3[%c0_5, %c0_6] : memref<16x128xf32, #tpu.memory_space<vmem>>, vector<1x96xf32>
    %6 = vector.broadcast %5 : vector<1x96xf32> to vector<128x96xf32>
    %7 = arith.addf %4, %6 : vector<128x96xf32>
    %8 = vector.extract_strided_slice %7 {offsets = [0, 0], sizes = [128, 32], strides = [1, 1]} : vector<128x96xf32> to vector<128x32xf32>
    %9 = vector.extract_strided_slice %7 {offsets = [0, 32], sizes = [128, 32], strides = [1, 1]} : vector<128x96xf32> to vector<128x32xf32>
    %10 = vector.extract_strided_slice %7 {offsets = [0, 64], sizes = [128, 32], strides = [1, 1]} : vector<128x96xf32> to vector<128x32xf32>
    %cst_7 = arith.constant dense<0.000000e+00> : vector<128x128xf32>
    %11 = tpu.matmul %8, %9, %cst_7 {dimension_numbers = #tpu.dot_dimension_numbers<[1], [1], [0], [0], [0, 0, 1, 0], [], []>} : vector<128x32xf32>, vector<128x32xf32>, vector<128x128xf32> -> vector<128x128xf32>
    %c0_8 = arith.constant 0 : index
    %c0_9 = arith.constant 0 : index
    %12 = vector.load %arg4[%c0_8, %c0_9] : memref<128x128xf32, #tpu.memory_space<vmem>>, vector<128x128xf32>
    %13 = arith.addf %11, %12 : vector<128x128xf32>
    %cst_10 = arith.constant dense<0xFF800000> : vector<128xf32>
    %14 = vector.multi_reduction <maximumf>, %13, %cst_10 [1] : vector<128x128xf32> to vector<128xf32>
    %15 = vector.shape_cast %14 : vector<128xf32> to vector<128x1xf32>
    %16 = vector.broadcast %15 : vector<128x1xf32> to vector<128x128xf32>
    %17 = arith.subf %13, %16 : vector<128x128xf32>
    %18 = math.exp %17 : vector<128x128xf32>
    %cst_11 = arith.constant dense<0.000000e+00> : vector<128xf32>
    %19 = vector.multi_reduction <add>, %18, %cst_11 [1] : vector<128x128xf32> to vector<128xf32>
    %20 = vector.shape_cast %19 : vector<128xf32> to vector<128x1xf32>
    %21 = tpu.reciprocal %20 {approx = true} : vector<128x1xf32> -> vector<128x1xf32>
    %22 = vector.broadcast %21 : vector<128x1xf32> to vector<128x128xf32>
    %23 = arith.mulf %18, %22 : vector<128x128xf32>
    %cst_12 = arith.constant dense<0.000000e+00> : vector<128x32xf32>
    %24 = tpu.matmul %23, %10, %cst_12 {dimension_numbers = #tpu.dot_dimension_numbers<[1], [0], [0], [1], [0, 0, 1, 1], [], []>} : vector<128x128xf32>, vector<128x32xf32>, vector<128x32xf32> -> vector<128x32xf32>
    %c0_13 = arith.constant 0 : index
    %c256 = arith.constant 256 : index
    %25 = vector.load %arg2[%c0_13, %c256] : memref<32x768xf32, #tpu.memory_space<vmem>>, vector<32x32xf32>
    %cst_14 = arith.constant dense<0.000000e+00> : vector<128x32xf32>
    %26 = tpu.matmul %24, %25, %cst_14 {dimension_numbers = #tpu.dot_dimension_numbers<[1], [0], [0], [1], [0, 0, 1, 1], [], []>} : vector<128x32xf32>, vector<32x32xf32>, vector<128x32xf32> -> vector<128x32xf32>
    %c1 = arith.constant 1 : index
    %c0_15 = arith.constant 0 : index
    %27 = vector.load %arg3[%c1, %c0_15] : memref<16x128xf32, #tpu.memory_space<vmem>>, vector<1x32xf32>
    %28 = vector.broadcast %27 : vector<1x32xf32> to vector<128x32xf32>
    %29 = arith.addf %26, %28 : vector<128x32xf32>
    %30 = arith.addf %2, %29 : vector<128x32xf32>
    %c2 = arith.constant 2 : index
    %c0_16 = arith.constant 0 : index
    %31 = vector.load %arg3[%c2, %c0_16] : memref<16x128xf32, #tpu.memory_space<vmem>>, vector<1x32xf32>
    %c3 = arith.constant 3 : index
    %c0_17 = arith.constant 0 : index
    %32 = vector.load %arg3[%c3, %c0_17] : memref<16x128xf32, #tpu.memory_space<vmem>>, vector<1x32xf32>
    %cst_18 = arith.constant dense<0.000000e+00> : vector<128xf32>
    %33 = vector.multi_reduction <add>, %30, %cst_18 [1] : vector<128x32xf32> to vector<128xf32>
    %34 = vector.shape_cast %33 : vector<128xf32> to vector<128x1xf32>
    %cst_19 = arith.constant 3.200000e+01 : f32
    %35 = vector.broadcast %cst_19 : f32 to vector<128x1xf32>
    %36 = arith.divf %34, %35 : vector<128x1xf32>
    %37 = arith.mulf %30, %30 : vector<128x32xf32>
    %cst_20 = arith.constant dense<0.000000e+00> : vector<128xf32>
    %38 = vector.multi_reduction <add>, %37, %cst_20 [1] : vector<128x32xf32> to vector<128xf32>
    %39 = vector.shape_cast %38 : vector<128xf32> to vector<128x1xf32>
    %cst_21 = arith.constant 3.200000e+01 : f32
    %40 = vector.broadcast %cst_21 : f32 to vector<128x1xf32>
    %41 = arith.divf %39, %40 : vector<128x1xf32>
    %42 = arith.mulf %36, %36 : vector<128x1xf32>
    %43 = arith.subf %41, %42 : vector<128x1xf32>
    %44 = vector.broadcast %36 : vector<128x1xf32> to vector<128x32xf32>
    %45 = arith.subf %30, %44 : vector<128x32xf32>
    %cst_22 = arith.constant 9.99999974E-6 : f32
    %46 = vector.broadcast %cst_22 : f32 to vector<128x1xf32>
    %47 = arith.addf %43, %46 : vector<128x1xf32>
    %48 = math.rsqrt %47 : vector<128x1xf32>
    %49 = vector.broadcast %48 : vector<128x1xf32> to vector<128x32xf32>
    %50 = arith.mulf %45, %49 : vector<128x32xf32>
    %51 = vector.broadcast %31 : vector<1x32xf32> to vector<128x32xf32>
    %52 = arith.mulf %50, %51 : vector<128x32xf32>
    %53 = vector.broadcast %32 : vector<1x32xf32> to vector<128x32xf32>
    %54 = arith.addf %52, %53 : vector<128x32xf32>
    %c0_23 = arith.constant 0 : index
    %c384 = arith.constant 384 : index
    %55 = vector.load %arg2[%c0_23, %c384] : memref<32x768xf32, #tpu.memory_space<vmem>>, vector<32x32xf32>
    %c0_24 = arith.constant 0 : index
    %c512 = arith.constant 512 : index
    %56 = vector.load %arg2[%c0_24, %c512] : memref<32x768xf32, #tpu.memory_space<vmem>>, vector<32x32xf32>
    %cst_25 = arith.constant dense<0.000000e+00> : vector<128x32xf32>
    %57 = tpu.matmul %54, %55, %cst_25 {dimension_numbers = #tpu.dot_dimension_numbers<[1], [0], [0], [1], [0, 0, 1, 1], [], []>} : vector<128x32xf32>, vector<32x32xf32>, vector<128x32xf32> -> vector<128x32xf32>
    %c4 = arith.constant 4 : index
    %c0_26 = arith.constant 0 : index
    %58 = vector.load %arg3[%c4, %c0_26] : memref<16x128xf32, #tpu.memory_space<vmem>>, vector<1x32xf32>
    %59 = vector.broadcast %58 : vector<1x32xf32> to vector<128x32xf32>
    %60 = arith.addf %57, %59 : vector<128x32xf32>
    %cst_27 = arith.constant 0.000000e+00 : f32
    %61 = vector.broadcast %cst_27 : f32 to vector<128x32xf32>
    %62 = arith.maximumf %60, %61 : vector<128x32xf32>
    %cst_28 = arith.constant dense<0.000000e+00> : vector<128x32xf32>
    %63 = tpu.matmul %62, %56, %cst_28 {dimension_numbers = #tpu.dot_dimension_numbers<[1], [0], [0], [1], [0, 0, 1, 1], [], []>} : vector<128x32xf32>, vector<32x32xf32>, vector<128x32xf32> -> vector<128x32xf32>
    %c5 = arith.constant 5 : index
    %c0_29 = arith.constant 0 : index
    %64 = vector.load %arg3[%c5, %c0_29] : memref<16x128xf32, #tpu.memory_space<vmem>>, vector<1x32xf32>
    %65 = vector.broadcast %64 : vector<1x32xf32> to vector<128x32xf32>
    %66 = arith.addf %63, %65 : vector<128x32xf32>
    %67 = arith.addf %54, %66 : vector<128x32xf32>
    %c6 = arith.constant 6 : index
    %c0_30 = arith.constant 0 : index
    %68 = vector.load %arg3[%c6, %c0_30] : memref<16x128xf32, #tpu.memory_space<vmem>>, vector<1x32xf32>
    %c7 = arith.constant 7 : index
    %c0_31 = arith.constant 0 : index
    %69 = vector.load %arg3[%c7, %c0_31] : memref<16x128xf32, #tpu.memory_space<vmem>>, vector<1x32xf32>
    %cst_32 = arith.constant dense<0.000000e+00> : vector<128xf32>
    %70 = vector.multi_reduction <add>, %67, %cst_32 [1] : vector<128x32xf32> to vector<128xf32>
    %71 = vector.shape_cast %70 : vector<128xf32> to vector<128x1xf32>
    %cst_33 = arith.constant 3.200000e+01 : f32
    %72 = vector.broadcast %cst_33 : f32 to vector<128x1xf32>
    %73 = arith.divf %71, %72 : vector<128x1xf32>
    %74 = arith.mulf %67, %67 : vector<128x32xf32>
    %cst_34 = arith.constant dense<0.000000e+00> : vector<128xf32>
    %75 = vector.multi_reduction <add>, %74, %cst_34 [1] : vector<128x32xf32> to vector<128xf32>
    %76 = vector.shape_cast %75 : vector<128xf32> to vector<128x1xf32>
    %cst_35 = arith.constant 3.200000e+01 : f32
    %77 = vector.broadcast %cst_35 : f32 to vector<128x1xf32>
    %78 = arith.divf %76, %77 : vector<128x1xf32>
    %79 = arith.mulf %73, %73 : vector<128x1xf32>
    %80 = arith.subf %78, %79 : vector<128x1xf32>
    %81 = vector.broadcast %73 : vector<128x1xf32> to vector<128x32xf32>
    %82 = arith.subf %67, %81 : vector<128x32xf32>
    %cst_36 = arith.constant 9.99999974E-6 : f32
    %83 = vector.broadcast %cst_36 : f32 to vector<128x1xf32>
    %84 = arith.addf %80, %83 : vector<128x1xf32>
    %85 = math.rsqrt %84 : vector<128x1xf32>
    %86 = vector.broadcast %85 : vector<128x1xf32> to vector<128x32xf32>
    %87 = arith.mulf %82, %86 : vector<128x32xf32>
    %88 = vector.broadcast %68 : vector<1x32xf32> to vector<128x32xf32>
    %89 = arith.mulf %87, %88 : vector<128x32xf32>
    %90 = vector.broadcast %69 : vector<1x32xf32> to vector<128x32xf32>
    %91 = arith.addf %89, %90 : vector<128x32xf32>
    %c0_37 = arith.constant 0 : index
    %c640 = arith.constant 640 : index
    %92 = vector.load %arg2[%c0_37, %c640] : memref<32x768xf32, #tpu.memory_space<vmem>>, vector<32x128xf32>
    %cst_38 = arith.constant dense<0.000000e+00> : vector<128x128xf32>
    %93 = tpu.matmul %91, %92, %cst_38 {dimension_numbers = #tpu.dot_dimension_numbers<[1], [0], [0], [1], [0, 0, 1, 1], [], []>} : vector<128x32xf32>, vector<32x128xf32>, vector<128x128xf32> -> vector<128x128xf32>
    %c8 = arith.constant 8 : index
    %c0_39 = arith.constant 0 : index
    %94 = vector.load %arg3[%c8, %c0_39] : memref<16x128xf32, #tpu.memory_space<vmem>>, vector<1x128xf32>
    %95 = vector.broadcast %94 : vector<1x128xf32> to vector<128x128xf32>
    %96 = arith.addf %93, %95 : vector<128x128xf32>
    %c0_40 = arith.constant 0 : index
    %c0_41 = arith.constant 0 : index
    %97 = vector.load %arg5[%c0_40, %c0_41] : memref<128x128xf32, #tpu.memory_space<vmem>>, vector<128x128xf32>
    tpu.vector_store %arg5[%c0_40, %c0_41], %96 {strides = array<i32>} : memref<128x128xf32, #tpu.memory_space<vmem>>, vector<128x128xf32>,
    return
  }
  func.func @transform_0(%arg0: i32) -> (i32, i32) {
    %c0_i32 = arith.constant 0 : i32
    %c0_i32_0 = arith.constant 0 : i32
    return %arg0, %c0_i32 : i32, i32
  }
  func.func @transform_1(%arg0: i32) -> (i32, i32) {
    %c0_i32 = arith.constant 0 : i32
    %c0_i32_0 = arith.constant 0 : i32
    %c0_i32_1 = arith.constant 0 : i32
    return %c0_i32, %c0_i32_0 : i32, i32
  }
  func.func @transform_2(%arg0: i32) -> (i32, i32) {
    %c0_i32 = arith.constant 0 : i32
    %c0_i32_0 = arith.constant 0 : i32
    %c0_i32_1 = arith.constant 0 : i32
    return %c0_i32, %c0_i32_0 : i32, i32
  }
  func.func @transform_3(%arg0: i32) -> (i32, i32) {
    %c0_i32 = arith.constant 0 : i32
    %c0_i32_0 = arith.constant 0 : i32
    %c0_i32_1 = arith.constant 0 : i32
    return %c0_i32, %c0_i32_0 : i32, i32
  }
  func.func @transform_4(%arg0: i32) -> (i32, i32) {
    %c0_i32 = arith.constant 0 : i32
    %c0_i32_0 = arith.constant 0 : i32
    return %arg0, %c0_i32 : i32, i32
  }
}

</mosaic_0001>

<llo_original>
// kernel: tpu_custom_call.1
$region0: #{tpu_custom_call.1}
  #allocation0 [shape = 'u32[]', space=smem, size = 0x4, offset = 0x4, fixed_abs, tag = 'smem constant byte address 0x4 - core index']
  #allocation1 [shape = 'u32[72,128]{1,0:T(1,128)}', space=vmem, size = 0x9000, scoped, tag = 'internal scratch']
  %s0 = inlined_call_operand.vmem [shape: f32[128,32], index: 0, kind: input, shape index: {}]
  %s1 = inlined_call_operand.hbm [shape: f32[32,768], index: 1, kind: input, shape index: {}]
  %s2 = inlined_call_operand.vmem [shape: f32[16,128], index: 2, kind: input, shape index: {}]
  %s3 = inlined_call_operand.vmem [shape: f32[128,128], index: 3, kind: input, shape index: {}]
  %s4 = inlined_call_operand.hbm [shape: f32[128,128], index: 4, kind: output, shape index: {}]
  %s5 = sld [smem:[#allocation0]]
  $region30: #{tpu_custom_call.1} parent=0
    _
  %s7 = ssub.s32 1, %s5
  %s8 = scalar_select 0, %s7, %s5
  $region1: #{tpu_custom_call.1} parent=0
    #allocation2 [shape = 'u8[98304]{0}', space=vmem, size = 0x18000, scoped, tag = 'input window, operand 1, single buffered']
    #allocation3 [shape = 's32[1]{0}', space=sflag, size = 0x4, scoped, tag = 'scoped memory for tpu_custom_call.1']
    #allocation4 [shape = 's32[1]{0}', space=sflag, size = 0x4, scoped, tag = 'scoped memory for tpu_custom_call.1']
    #allocation5 [shape = 'u8[65536]{0}', space=vmem, size = 0x10000, scoped, tag = 'output window, operand 0, single buffered']
    %9 = vsyncpa [#allocation3], 0
    %10 = vsyncpa [#allocation4], 0
    // Predicated region
    $region2: #{tpu_custom_call.1} parent=1 // pred_check
      _
    $region3: #{tpu_custom_call.1} parent=1 // pred_check_branch
      %12 = sbr.rel (0) target = $region5
    $region4: #{tpu_custom_call.1} parent=1 // pred_region
      _
    $region5: #{tpu_custom_call.1} parent=1 // pred_fallthru
      _
    // Predicated region
    $region6: #{tpu_custom_call.1} parent=1 // pred_check
      _
    $region7: #{tpu_custom_call.1} parent=1 // pred_check_branch
      %14 = sbr.rel (0) target = $region9
    $region8: #{tpu_custom_call.1} parent=1 // pred_region
      %16 = vsyncadd [#allocation3], 0
      %s17 = sshll.u32 %s1, 4
      %s18 = int_to_ptr.hbm [resolvable:$true] %s17
      %s19 = sshll.u32 [#allocation2], 4
      %s20 = int_to_ptr.vmem [resolvable:$true] %s19
      %25 = dma.hbm_to_vmem [thread:$0]  %s18, 3072, %s20, [#allocation3], 768, 768, 48
    $region9: #{tpu_custom_call.1} parent=1 // pred_fallthru
      _
    // Predicated region
    $region10: #{tpu_custom_call.1} parent=1 // pred_check
      _
    $region11: #{tpu_custom_call.1} parent=1 // pred_check_branch
      %27 = sbr.rel (0) target = $region13
    $region12: #{tpu_custom_call.1} parent=1 // pred_region
      _
    $region13: #{tpu_custom_call.1} parent=1 // pred_fallthru
      _
    // Predicated region
    $region14: #{tpu_custom_call.1} parent=1 // pred_check
      _
    $region15: #{tpu_custom_call.1} parent=1 // pred_check_branch
      %29 = sbr.rel (0) target = $region17
    $region16: #{tpu_custom_call.1} parent=1 // pred_region
      _
    $region17: #{tpu_custom_call.1} parent=1 // pred_fallthru
      _
    // Predicated region
    $region18: #{tpu_custom_call.1} parent=1 // pred_check
      _
    $region19: #{tpu_custom_call.1} parent=1 // pred_check_branch
      %31 = sbr.rel (0) target = $region21
    $region20: #{tpu_custom_call.1} parent=1 // pred_region
      %33 = dma.done [#allocation3], 3072
    $region21: #{tpu_custom_call.1} parent=1 // pred_fallthru
      _
    %v34 = vld [vmem:[#allocation2] sm:$0xff]
    %v35 = vld [vmem:[#allocation2 + $0x30] sm:$0xff]
    %v36 = vld [vmem:[#allocation2 + $0x60] sm:$0xff]
    %v37 = vld [vmem:[#allocation2 + $0x90] sm:$0xff]
    %v38 = vld [vmem:[%s0] sm:$0xff]
    %v39 = vld [vmem:[%s0 + $0x8] sm:$0xff]
    %v40 = vld [vmem:[%s0 + $0x10] sm:$0xff]
    %v41 = vld [vmem:[%s0 + $0x18] sm:$0xff]
    %v42 = vld [vmem:[%s0 + $0x20] sm:$0xff]
    %v43 = vld [vmem:[%s0 + $0x28] sm:$0xff]
    %v44 = vld [vmem:[%s0 + $0x30] sm:$0xff]
    %v45 = vld [vmem:[%s0 + $0x38] sm:$0xff]
    %v46 = vld [vmem:[%s0 + $0x40] sm:$0xff]
    %v47 = vld [vmem:[%s0 + $0x48] sm:$0xff]
    %v48 = vld [vmem:[%s0 + $0x50] sm:$0xff]
    %v49 = vld [vmem:[%s0 + $0x58] sm:$0xff]
    %v50 = vld [vmem:[%s0 + $0x60] sm:$0xff]
    %v51 = vld [vmem:[%s0 + $0x68] sm:$0xff]
    %v52 = vld [vmem:[%s0 + $0x70] sm:$0xff]
    %v53 = vld [vmem:[%s0 + $0x78] sm:$0xff]
    %vm54 = vcmask 261120
    %v56 = vsel %vm54, %v38, 0
    %v59 = vsel %vm54, %v39, 0
    %v62 = vsel %vm54, %v40, 0
    %v65 = vsel %vm54, %v41, 0
    %v68 = vsel %vm54, %v42, 0
    %v71 = vsel %vm54, %v43, 0
    %v74 = vsel %vm54, %v44, 0
    %v77 = vsel %vm54, %v45, 0
    %v80 = vsel %vm54, %v46, 0
    %v83 = vsel %vm54, %v47, 0
    %v86 = vsel %vm54, %v48, 0
    %v89 = vsel %vm54, %v49, 0
    %v92 = vsel %vm54, %v50, 0
    %v95 = vsel %vm54, %v51, 0
    %v98 = vsel %vm54, %v52, 0
    %v101 = vsel %vm54, %v53, 0
    %103 = vmatpush.msra.mxu0 0.0
    %104 = vmatpush.msra.mxu0 0.0
    %105 = vmatpush.msra.mxu0 0.0
    %106 = vmatpush.msra.mxu0 0.0
    %107 = vmatpush.msra.mxu0 0.0
    %108 = vmatpush.msra.mxu0 0.0
    %109 = vmatpush.msra.mxu0 0.0
    %110 = vmatpush.msra.mxu0 0.0
    %111 = vmatpush.msra.mxu0 0.0
    %112 = vmatpush.msra.mxu0 0.0
    %113 = vmatpush.msra.mxu0 0.0
    %114 = vmatpush.msra.mxu0 0.0
    %115 = vmatpush.msra.mxu0 %v37
    %116 = vmatpush.msra.mxu0 %v36
    %117 = vmatpush.msra.mxu0 %v35
    %118 = vmatpush.msra.mxu0 %v34
    %119 = vmatmul.f32.gmra.mxu0 %v56
    %v120 = vpop.f32.mrf.mxu0
    %v121 = vadd.f32 0.0, %v120
    %122 = vmatmul.f32.gmra.mxu0 %v59
    %v123 = vpop.f32.mrf.mxu0
    %v124 = vadd.f32 0.0, %v123
    %125 = vmatmul.f32.gmra.mxu0 %v62
    %v126 = vpop.f32.mrf.mxu0
    %v127 = vadd.f32 0.0, %v126
    %128 = vmatmul.f32.gmra.mxu0 %v65
    %v129 = vpop.f32.mrf.mxu0
    %v130 = vadd.f32 0.0, %v129
    %131 = vmatmul.f32.gmra.mxu0 %v68
    %v132 = vpop.f32.mrf.mxu0
    %v133 = vadd.f32 0.0, %v132
    %134 = vmatmul.f32.gmra.mxu0 %v71
    %v135 = vpop.f32.mrf.mxu0
    %v136 = vadd.f32 0.0, %v135
    %137 = vmatmul.f32.gmra.mxu0 %v74
    %v138 = vpop.f32.mrf.mxu0
    %v139 = vadd.f32 0.0, %v138
    %140 = vmatmul.f32.gmra.mxu0 %v77
    %v141 = vpop.f32.mrf.mxu0
    %v142 = vadd.f32 0.0, %v141
    %143 = vmatmul.f32.gmra.mxu0 %v80
    %v144 = vpop.f32.mrf.mxu0
    %v145 = vadd.f32 0.0, %v144
    %146 = vmatmul.f32.gmra.mxu0 %v83
    %v147 = vpop.f32.mrf.mxu0
    %v148 = vadd.f32 0.0, %v147
    %149 = vmatmul.f32.gmra.mxu0 %v86
    %v150 = vpop.f32.mrf.mxu0
    %v151 = vadd.f32 0.0, %v150
    %152 = vmatmul.f32.gmra.mxu0 %v89
    %v153 = vpop.f32.mrf.mxu0
    %v154 = vadd.f32 0.0, %v153
    %155 = vmatmul.f32.gmra.mxu0 %v92
    %v156 = vpop.f32.mrf.mxu0
    %v157 = vadd.f32 0.0, %v156
    %158 = vmatmul.f32.gmra.mxu0 %v95
    %v159 = vpop.f32.mrf.mxu0
    %v160 = vadd.f32 0.0, %v159
    %161 = vmatmul.f32.gmra.mxu0 %v98
    %v162 = vpop.f32.mrf.mxu0
    %v163 = vadd.f32 0.0, %v162
    %164 = vmatmul.f32.gmra.mxu0 %v101
    %v165 = vpop.f32.mrf.mxu0
    %v166 = vadd.f32 0.0, %v165
    %167 = vdwg.mxu0
    %v168 = vld [vmem:[#allocation2 + $0x8] sm:$0xff]
    %v169 = vld [vmem:[#allocation2 + $0x38] sm:$0xff]
    %v170 = vld [vmem:[#allocation2 + $0x68] sm:$0xff]
    %v171 = vld [vmem:[#allocation2 + $0x98] sm:$0xff]
    %v172 = vld [vmem:[%s2] sm:$0x1]
    %v173 = vperm.slane %v172, 0
    %v175 = vsel %vm54, %v121, 0
    %v178 = vsel %vm54, %v124, 0
    %v181 = vsel %vm54, %v127, 0
    %v184 = vsel %vm54, %v130, 0
    %v187 = vsel %vm54, %v133, 0
    %v190 = vsel %vm54, %v136, 0
    %v193 = vsel %vm54, %v139, 0
    %v196 = vsel %vm54, %v142, 0
    %v199 = vsel %vm54, %v145, 0
    %v202 = vsel %vm54, %v148, 0
    %v205 = vsel %vm54, %v151, 0
    %v208 = vsel %vm54, %v154, 0
    %v211 = vsel %vm54, %v157, 0
    %v214 = vsel %vm54, %v160, 0
    %v217 = vsel %vm54, %v163, 0
    %v220 = vsel %vm54, %v166, 0
    %222 = vmatpush.msra.mxu0 0.0
    %223 = vmatpush.msra.mxu0 0.0
    %224 = vmatpush.msra.mxu0 0.0
    %225 = vmatpush.msra.mxu0 0.0
    %226 = vmatpush.msra.mxu0 0.0
    %227 = vmatpush.msra.mxu0 0.0
    %228 = vmatpush.msra.mxu0 0.0
    %229 = vmatpush.msra.mxu0 0.0
    %230 = vmatpush.msra.mxu0 0.0
    %231 = vmatpush.msra.mxu0 0.0
    %232 = vmatpush.msra.mxu0 0.0
    %233 = vmatpush.msra.mxu0 0.0
    %234 = vmatpush.msra.mxu0 %v171
    %235 = vmatpush.msra.mxu0 %v170
    %236 = vmatpush.msra.mxu0 %v169
    %237 = vmatpush.msra.mxu0 %v168
    %238 = vmatmul.f32.gmra.mxu0 %v175
    %v239 = vpop.f32.mrf.mxu0
    %v240 = vadd.f32 %v173, %v239
    %241 = vmatmul.f32.gmra.mxu0 %v178
    %v242 = vpop.f32.mrf.mxu0
    %v243 = vadd.f32 %v173, %v242
    %244 = vmatmul.f32.gmra.mxu0 %v181
    %v245 = vpop.f32.mrf.mxu0
    %v246 = vadd.f32 %v173, %v245
    %247 = vmatmul.f32.gmra.mxu0 %v184
    %v248 = vpop.f32.mrf.mxu0
    %v249 = vadd.f32 %v173, %v248
    %250 = vmatmul.f32.gmra.mxu0 %v187
    %v251 = vpop.f32.mrf.mxu0
    %v252 = vadd.f32 %v173, %v251
    %253 = vmatmul.f32.gmra.mxu0 %v190
    %v254 = vpop.f32.mrf.mxu0
    %v255 = vadd.f32 %v173, %v254
    %256 = vmatmul.f32.gmra.mxu0 %v193
    %v257 = vpop.f32.mrf.mxu0
    %v258 = vadd.f32 %v173, %v257
    %259 = vmatmul.f32.gmra.mxu0 %v196
    %v260 = vpop.f32.mrf.mxu0
    %v261 = vadd.f32 %v173, %v260
    %262 = vmatmul.f32.gmra.mxu0 %v199
    %v263 = vpop.f32.mrf.mxu0
    %v264 = vadd.f32 %v173, %v263
    %265 = vmatmul.f32.gmra.mxu0 %v202
    %v266 = vpop.f32.mrf.mxu0
    %v267 = vadd.f32 %v173, %v266
    %268 = vmatmul.f32.gmra.mxu0 %v205
    %v269 = vpop.f32.mrf.mxu0
    %v270 = vadd.f32 %v173, %v269
    %271 = vmatmul.f32.gmra.mxu0 %v208
    %v272 = vpop.f32.mrf.mxu0
    %v273 = vadd.f32 %v173, %v272
    %274 = vmatmul.f32.gmra.mxu0 %v211
    %v275 = vpop.f32.mrf.mxu0
    %v276 = vadd.f32 %v173, %v275
    %277 = vmatmul.f32.gmra.mxu0 %v214
    %v278 = vpop.f32.mrf.mxu0
    %v279 = vadd.f32 %v173, %v278
    %280 = vmatmul.f32.gmra.mxu0 %v217
    %v281 = vpop.f32.mrf.mxu0
    %v282 = vadd.f32 %v173, %v281
    %283 = vmatmul.f32.gmra.mxu0 %v220
    %v284 = vpop.f32.mrf.mxu0
    %v285 = vadd.f32 %v173, %v284
    %286 = vdwg.mxu0
    %v287 = vld [vmem:[%s3] sm:$0xff]
    %v288 = vld [vmem:[%s3 + $0x8] sm:$0xff]
    %v289 = vld [vmem:[%s3 + $0x10] sm:$0xff]
    %v290 = vld [vmem:[%s3 + $0x18] sm:$0xff]
    %v291 = vld [vmem:[%s3 + $0x20] sm:$0xff]
    %v292 = vld [vmem:[%s3 + $0x28] sm:$0xff]
    %v293 = vld [vmem:[%s3 + $0x30] sm:$0xff]
    %v294 = vld [vmem:[%s3 + $0x38] sm:$0xff]
    %v295 = vld [vmem:[%s3 + $0x40] sm:$0xff]
    %v296 = vld [vmem:[%s3 + $0x48] sm:$0xff]
    %v297 = vld [vmem:[%s3 + $0x50] sm:$0xff]
    %v298 = vld [vmem:[%s3 + $0x58] sm:$0xff]
    %v299 = vld [vmem:[%s3 + $0x60] sm:$0xff]
    %v300 = vld [vmem:[%s3 + $0x68] sm:$0xff]
    %v301 = vld [vmem:[%s3 + $0x70] sm:$0xff]
    %v302 = vld [vmem:[%s3 + $0x78] sm:$0xff]
    %319 = vrot.lane.b32.xlu0 %v240, 96
    %v320 = vpop.permute.xlu0 %319
    %321 = vrot.lane.b32.xlu0 %v243, 96
    %v322 = vpop.permute.xlu0 %321
    %323 = vrot.lane.b32.xlu0 %v246, 96
    %v324 = vpop.permute.xlu0 %323
    %325 = vrot.lane.b32.xlu0 %v249, 96
    %v326 = vpop.permute.xlu0 %325
    %327 = vrot.lane.b32.xlu0 %v252, 96
    %v328 = vpop.permute.xlu0 %327
    %329 = vrot.lane.b32.xlu0 %v255, 96
    %v330 = vpop.permute.xlu0 %329
    %331 = vrot.lane.b32.xlu0 %v258, 96
    %v332 = vpop.permute.xlu0 %331
    %333 = vrot.lane.b32.xlu0 %v261, 96
    %v334 = vpop.permute.xlu0 %333
    %335 = vrot.lane.b32.xlu0 %v264, 96
    %v336 = vpop.permute.xlu0 %335
    %337 = vrot.lane.b32.xlu0 %v267, 96
    %v338 = vpop.permute.xlu0 %337
    %339 = vrot.lane.b32.xlu0 %v270, 96
    %v340 = vpop.permute.xlu0 %339
    %341 = vrot.lane.b32.xlu0 %v273, 96
    %v342 = vpop.permute.xlu0 %341
    %343 = vrot.lane.b32.xlu0 %v276, 96
    %v344 = vpop.permute.xlu0 %343
    %345 = vrot.lane.b32.xlu0 %v279, 96
    %v346 = vpop.permute.xlu0 %345
    %347 = vrot.lane.b32.xlu0 %v282, 96
    %v348 = vpop.permute.xlu0 %347
    %349 = vrot.lane.b32.xlu0 %v285, 96
    %v350 = vpop.permute.xlu0 %349
    %v351 = vsel %vm54, %v240, 0
    %v353 = vsel %vm54, %v243, 0
    %v355 = vsel %vm54, %v246, 0
    %v357 = vsel %vm54, %v249, 0
    %v359 = vsel %vm54, %v252, 0
    %v361 = vsel %vm54, %v255, 0
    %v363 = vsel %vm54, %v258, 0
    %v365 = vsel %vm54, %v261, 0
    %v367 = vsel %vm54, %v264, 0
    %v369 = vsel %vm54, %v267, 0
    %v371 = vsel %vm54, %v270, 0
    %v373 = vsel %vm54, %v273, 0
    %v375 = vsel %vm54, %v276, 0
    %v377 = vsel %vm54, %v279, 0
    %v379 = vsel %vm54, %v282, 0
    %v381 = vsel %vm54, %v285, 0
    %v383 = vsel %vm54, %v320, 0
    %v385 = vsel %vm54, %v322, 0
    %v387 = vsel %vm54, %v324, 0
    %v389 = vsel %vm54, %v326, 0
    %v391 = vsel %vm54, %v328, 0
    %v393 = vsel %vm54, %v330, 0
    %v395 = vsel %vm54, %v332, 0
    %v397 = vsel %vm54, %v334, 0
    %v399 = vsel %vm54, %v336, 0
    %v401 = vsel %vm54, %v338, 0
    %v403 = vsel %vm54, %v340, 0
    %v405 = vsel %vm54, %v342, 0
    %v407 = vsel %vm54, %v344, 0
    %v409 = vsel %vm54, %v346, 0
    %v411 = vsel %vm54, %v348, 0
    %v413 = vsel %vm54, %v350, 0
    %415 = vmatpush.xpose.msra.mxu0 %v413
    %416 = vmatpush.xpose.msra.mxu0 %v411
    %417 = vmatpush.xpose.msra.mxu0 %v409
    %418 = vmatpush.xpose.msra.mxu0 %v407
    %419 = vmatpush.xpose.msra.mxu0 %v405
    %420 = vmatpush.xpose.msra.mxu0 %v403
    %421 = vmatpush.xpose.msra.mxu0 %v401
    %422 = vmatpush.xpose.msra.mxu0 %v399
    %423 = vmatpush.xpose.msra.mxu0 %v397
    %424 = vmatpush.xpose.msra.mxu0 %v395
    %425 = vmatpush.xpose.msra.mxu0 %v393
    %426 = vmatpush.xpose.msra.mxu0 %v391
    %427 = vmatpush.xpose.msra.mxu0 %v389
    %428 = vmatpush.xpose.msra.mxu0 %v387
    %429 = vmatpush.xpose.msra.mxu0 %v385
    %430 = vmatpush.xpose.msra.mxu0 %v383
    %431 = vmatmul.f32.gmra.mxu0 %v351
    %v432 = vpop.f32.mrf.mxu0
    %v433 = vadd.f32 %v287, %v432
    %434 = vmatmul.f32.gmra.mxu0 %v353
    %v435 = vpop.f32.mrf.mxu0
    %v436 = vadd.f32 %v288, %v435
    %437 = vmatmul.f32.gmra.mxu0 %v355
    %v438 = vpop.f32.mrf.mxu0
    %v439 = vadd.f32 %v289, %v438
    %440 = vmatmul.f32.gmra.mxu0 %v357
    %v441 = vpop.f32.mrf.mxu0
    %v442 = vadd.f32 %v290, %v441
    %443 = vmatmul.f32.gmra.mxu0 %v359
    %v444 = vpop.f32.mrf.mxu0
    %v445 = vadd.f32 %v291, %v444
    %446 = vmatmul.f32.gmra.mxu0 %v361
    %v447 = vpop.f32.mrf.mxu0
    %v448 = vadd.f32 %v292, %v447
    %449 = vmatmul.f32.gmra.mxu0 %v363
    %v450 = vpop.f32.mrf.mxu0
    %v451 = vadd.f32 %v293, %v450
    %452 = vmatmul.f32.gmra.mxu0 %v365
    %v453 = vpop.f32.mrf.mxu0
    %v454 = vadd.f32 %v294, %v453
    %455 = vmatmul.f32.gmra.mxu0 %v367
    %v456 = vpop.f32.mrf.mxu0
    %v457 = vadd.f32 %v295, %v456
    %458 = vmatmul.f32.gmra.mxu0 %v369
    %v459 = vpop.f32.mrf.mxu0
    %v460 = vadd.f32 %v296, %v459
    %461 = vmatmul.f32.gmra.mxu0 %v371
    %v462 = vpop.f32.mrf.mxu0
    %v463 = vadd.f32 %v297, %v462
    %464 = vmatmul.f32.gmra.mxu0 %v373
    %v465 = vpop.f32.mrf.mxu0
    %v466 = vadd.f32 %v298, %v465
    %467 = vmatmul.f32.gmra.mxu0 %v375
    %v468 = vpop.f32.mrf.mxu0
    %v469 = vadd.f32 %v299, %v468
    %470 = vmatmul.f32.gmra.mxu0 %v377
    %v471 = vpop.f32.mrf.mxu0
    %v472 = vadd.f32 %v300, %v471
    %473 = vmatmul.f32.gmra.mxu0 %v379
    %v474 = vpop.f32.mrf.mxu0
    %v475 = vadd.f32 %v301, %v474
    %476 = vmatmul.f32.gmra.mxu0 %v381
    %v477 = vpop.f32.mrf.mxu0
    %v478 = vadd.f32 %v302, %v477
    %479 = vdwg.mxu0
    %480 = vmax.xlane.f32.xlu0 %v433
    %v481 = vpop.xlane.xlu0 %480
    %482 = vmax.xlane.f32.xlu0 %v436
    %v483 = vpop.xlane.xlu0 %482
    %484 = vmax.xlane.f32.xlu0 %v439
    %v485 = vpop.xlane.xlu0 %484
    %486 = vmax.xlane.f32.xlu0 %v442
    %v487 = vpop.xlane.xlu0 %486
    %488 = vmax.xlane.f32.xlu0 %v445
    %v489 = vpop.xlane.xlu0 %488
    %490 = vmax.xlane.f32.xlu0 %v448
    %v491 = vpop.xlane.xlu0 %490
    %492 = vmax.xlane.f32.xlu0 %v451
    %v493 = vpop.xlane.xlu0 %492
    %494 = vmax.xlane.f32.xlu0 %v454
    %v495 = vpop.xlane.xlu0 %494
    %496 = vmax.xlane.f32.xlu0 %v457
    %v497 = vpop.xlane.xlu0 %496
    %498 = vmax.xlane.f32.xlu0 %v460
    %v499 = vpop.xlane.xlu0 %498
    %500 = vmax.xlane.f32.xlu0 %v463
    %v501 = vpop.xlane.xlu0 %500
    %502 = vmax.xlane.f32.xlu0 %v466
    %v503 = vpop.xlane.xlu0 %502
    %504 = vmax.xlane.f32.xlu0 %v469
    %v505 = vpop.xlane.xlu0 %504
    %506 = vmax.xlane.f32.xlu0 %v472
    %v507 = vpop.xlane.xlu0 %506
    %508 = vmax.xlane.f32.xlu0 %v475
    %v509 = vpop.xlane.xlu0 %508
    %510 = vmax.xlane.f32.xlu0 %v478
    %v511 = vpop.xlane.xlu0 %510
    %v512 = vsub.f32 %v433, %v481
    %v513 = vsub.f32 %v436, %v483
    %v514 = vsub.f32 %v439, %v485
    %v515 = vsub.f32 %v442, %v487
    %v516 = vsub.f32 %v445, %v489
    %v517 = vsub.f32 %v448, %v491
    %v518 = vsub.f32 %v451, %v493
    %v519 = vsub.f32 %v454, %v495
    %v520 = vsub.f32 %v457, %v497
    %v521 = vsub.f32 %v460, %v499
    %v522 = vsub.f32 %v463, %v501
    %v523 = vsub.f32 %v466, %v503
    %v524 = vsub.f32 %v469, %v505
    %v525 = vsub.f32 %v472, %v507
    %v526 = vsub.f32 %v475, %v509
    %v527 = vsub.f32 %v478, %v511
    %v528 = vmul.f32 %v512, 1.442695
    %v529 = vpow.pop %v528
    %v530 = vmul.f32 %v513, 1.442695
    %v531 = vpow.pop %v530
    %v532 = vmul.f32 %v514, 1.442695
    %v533 = vpow.pop %v532
    %v534 = vmul.f32 %v515, 1.442695
    %v535 = vpow.pop %v534
    %v536 = vmul.f32 %v516, 1.442695
    %v537 = vpow.pop %v536
    %v538 = vmul.f32 %v517, 1.442695
    %v539 = vpow.pop %v538
    %v540 = vmul.f32 %v518, 1.442695
    %v541 = vpow.pop %v540
    %v542 = vmul.f32 %v519, 1.442695
    %v543 = vpow.pop %v542
    %v544 = vmul.f32 %v520, 1.442695
    %v545 = vpow.pop %v544
    %v546 = vmul.f32 %v521, 1.442695
    %v547 = vpow.pop %v546
    %v548 = vmul.f32 %v522, 1.442695
    %v549 = vpow.pop %v548
    %v550 = vmul.f32 %v523, 1.442695
    %v551 = vpow.pop %v550
    %v552 = vmul.f32 %v524, 1.442695
    %v553 = vpow.pop %v552
    %v554 = vmul.f32 %v525, 1.442695
    %v555 = vpow.pop %v554
    %v556 = vmul.f32 %v526, 1.442695
    %v557 = vpow.pop %v556
    %v558 = vmul.f32 %v527, 1.442695
    %v559 = vpow.pop %v558
    %560 = vadd.xlane.f32.xlu0 %v529
    %v561 = vpop.xlane.xlu0 %560
    %562 = vadd.xlane.f32.xlu0 %v531
    %v563 = vpop.xlane.xlu0 %562
    %564 = vadd.xlane.f32.xlu0 %v533
    %v565 = vpop.xlane.xlu0 %564
    %566 = vadd.xlane.f32.xlu0 %v535
    %v567 = vpop.xlane.xlu0 %566
    %568 = vadd.xlane.f32.xlu0 %v537
    %v569 = vpop.xlane.xlu0 %568
    %570 = vadd.xlane.f32.xlu0 %v539
    %v571 = vpop.xlane.xlu0 %570
    %572 = vadd.xlane.f32.xlu0 %v541
    %v573 = vpop.xlane.xlu0 %572
    %574 = vadd.xlane.f32.xlu0 %v543
    %v575 = vpop.xlane.xlu0 %574
    %576 = vadd.xlane.f32.xlu0 %v545
    %v577 = vpop.xlane.xlu0 %576
    %578 = vadd.xlane.f32.xlu0 %v547
    %v579 = vpop.xlane.xlu0 %578
    %580 = vadd.xlane.f32.xlu0 %v549
    %v581 = vpop.xlane.xlu0 %580
    %582 = vadd.xlane.f32.xlu0 %v551
    %v583 = vpop.xlane.xlu0 %582
    %584 = vadd.xlane.f32.xlu0 %v553
    %v585 = vpop.xlane.xlu0 %584
    %586 = vadd.xlane.f32.xlu0 %v555
    %v587 = vpop.xlane.xlu0 %586
    %588 = vadd.xlane.f32.xlu0 %v557
    %v589 = vpop.xlane.xlu0 %588
    %590 = vadd.xlane.f32.xlu0 %v559
    %v591 = vpop.xlane.xlu0 %590
    %v592 = vrcp.pop %v561
    %v593 = vrcp.pop %v563
    %v594 = vrcp.pop %v565
    %v595 = vrcp.pop %v567
    %v596 = vrcp.pop %v569
    %v597 = vrcp.pop %v571
    %v598 = vrcp.pop %v573
    %v599 = vrcp.pop %v575
    %v600 = vrcp.pop %v577
    %v601 = vrcp.pop %v579
    %v602 = vrcp.pop %v581
    %v603 = vrcp.pop %v583
    %v604 = vrcp.pop %v585
    %v605 = vrcp.pop %v587
    %v606 = vrcp.pop %v589
    %v607 = vrcp.pop %v591
    %v608 = vmul.f32 %v529, %v592
    %v609 = vmul.f32 %v531, %v593
    %v610 = vmul.f32 %v533, %v594
    %v611 = vmul.f32 %v535, %v595
    %v612 = vmul.f32 %v537, %v596
    %v613 = vmul.f32 %v539, %v597
    %v614 = vmul.f32 %v541, %v598
    %v615 = vmul.f32 %v543, %v599
    %v616 = vmul.f32 %v545, %v600
    %v617 = vmul.f32 %v547, %v601
    %v618 = vmul.f32 %v549, %v602
    %v619 = vmul.f32 %v551, %v603
    %v620 = vmul.f32 %v553, %v604
    %v621 = vmul.f32 %v555, %v605
    %v622 = vmul.f32 %v557, %v606
    %v623 = vmul.f32 %v559, %v607
    %624 = vrot.lane.b32.xlu0 %v240, 64
    %v625 = vpop.permute.xlu0 %624
    %626 = vrot.lane.b32.xlu0 %v243, 64
    %v627 = vpop.permute.xlu0 %626
    %628 = vrot.lane.b32.xlu0 %v246, 64
    %v629 = vpop.permute.xlu0 %628
    %630 = vrot.lane.b32.xlu0 %v249, 64
    %v631 = vpop.permute.xlu0 %630
    %632 = vrot.lane.b32.xlu0 %v252, 64
    %v633 = vpop.permute.xlu0 %632
    %634 = vrot.lane.b32.xlu0 %v255, 64
    %v635 = vpop.permute.xlu0 %634
    %636 = vrot.lane.b32.xlu0 %v258, 64
    %v637 = vpop.permute.xlu0 %636
    %638 = vrot.lane.b32.xlu0 %v261, 64
    %v639 = vpop.permute.xlu0 %638
    %640 = vrot.lane.b32.xlu0 %v264, 64
    %v641 = vpop.permute.xlu0 %640
    %642 = vrot.lane.b32.xlu0 %v267, 64
    %v643 = vpop.permute.xlu0 %642
    %644 = vrot.lane.b32.xlu0 %v270, 64
    %v645 = vpop.permute.xlu0 %644
    %646 = vrot.lane.b32.xlu0 %v273, 64
    %v647 = vpop.permute.xlu0 %646
    %648 = vrot.lane.b32.xlu0 %v276, 64
    %v649 = vpop.permute.xlu0 %648
    %650 = vrot.lane.b32.xlu0 %v279, 64
    %v651 = vpop.permute.xlu0 %650
    %652 = vrot.lane.b32.xlu0 %v282, 64
    %v653 = vpop.permute.xlu0 %652
    %654 = vrot.lane.b32.xlu0 %v285, 64
    %v655 = vpop.permute.xlu0 %654
    %672 = vmatpush.msra.mxu0 %v655
    %673 = vmatpush.msra.mxu0 %v653
    %674 = vmatpush.msra.mxu0 %v651
    %675 = vmatpush.msra.mxu0 %v649
    %676 = vmatpush.msra.mxu0 %v647
    %677 = vmatpush.msra.mxu0 %v645
    %678 = vmatpush.msra.mxu0 %v643
    %679 = vmatpush.msra.mxu0 %v641
    %680 = vmatpush.msra.mxu0 %v639
    %681 = vmatpush.msra.mxu0 %v637
    %682 = vmatpush.msra.mxu0 %v635
    %683 = vmatpush.msra.mxu0 %v633
    %684 = vmatpush.msra.mxu0 %v631
    %685 = vmatpush.msra.mxu0 %v629
    %686 = vmatpush.msra.mxu0 %v627
    %687 = vmatpush.msra.mxu0 %v625
    %688 = vmatmul.f32.gmra.mxu0 %v608
    %v689 = vpop.f32.mrf.mxu0
    %v690 = vadd.f32 0.0, %v689
    %691 = vmatmul.f32.gmra.mxu0 %v609
    %v692 = vpop.f32.mrf.mxu0
    %v693 = vadd.f32 0.0, %v692
    %694 = vmatmul.f32.gmra.mxu0 %v610
    %v695 = vpop.f32.mrf.mxu0
    %v696 = vadd.f32 0.0, %v695
    %697 = vmatmul.f32.gmra.mxu0 %v611
    %v698 = vpop.f32.mrf.mxu0
    %v699 = vadd.f32 0.0, %v698
    %700 = vmatmul.f32.gmra.mxu0 %v612
    %v701 = vpop.f32.mrf.mxu0
    %v702 = vadd.f32 0.0, %v701
    %703 = vmatmul.f32.gmra.mxu0 %v613
    %v704 = vpop.f32.mrf.mxu0
    %v705 = vadd.f32 0.0, %v704
    %706 = vmatmul.f32.gmra.mxu0 %v614
    %v707 = vpop.f32.mrf.mxu0
    %v708 = vadd.f32 0.0, %v707
    %709 = vmatmul.f32.gmra.mxu0 %v615
    %v710 = vpop.f32.mrf.mxu0
    %v711 = vadd.f32 0.0, %v710
    %712 = vmatmul.f32.gmra.mxu0 %v616
    %v713 = vpop.f32.mrf.mxu0
    %v714 = vadd.f32 0.0, %v713
    %715 = vmatmul.f32.gmra.mxu0 %v617
    %v716 = vpop.f32.mrf.mxu0
    %v717 = vadd.f32 0.0, %v716
    %718 = vmatmul.f32.gmra.mxu0 %v618
    %v719 = vpop.f32.mrf.mxu0
    %v720 = vadd.f32 0.0, %v719
    %721 = vmatmul.f32.gmra.mxu0 %v619
    %v722 = vpop.f32.mrf.mxu0
    %v723 = vadd.f32 0.0, %v722
    %724 = vmatmul.f32.gmra.mxu0 %v620
    %v725 = vpop.f32.mrf.mxu0
    %v726 = vadd.f32 0.0, %v725
    %727 = vmatmul.f32.gmra.mxu0 %v621
    %v728 = vpop.f32.mrf.mxu0
    %v729 = vadd.f32 0.0, %v728
    %730 = vmatmul.f32.gmra.mxu0 %v622
    %v731 = vpop.f32.mrf.mxu0
    %v732 = vadd.f32 0.0, %v731
    %733 = vmatmul.f32.gmra.mxu0 %v623
    %v734 = vpop.f32.mrf.mxu0
    %v735 = vadd.f32 0.0, %v734
    %736 = vdwg.mxu0
    %v737 = vld [vmem:[#allocation2 + $0x10] sm:$0xff]
    %v738 = vld [vmem:[#allocation2 + $0x40] sm:$0xff]
    %v739 = vld [vmem:[#allocation2 + $0x70] sm:$0xff]
    %v740 = vld [vmem:[#allocation2 + $0xa0] sm:$0xff]
    %v741 = vld [vmem:[%s2 + $0x1] sm:$0x1]
    %v742 = vperm.slane %v741, 0
    %v744 = vsel %vm54, %v690, 0
    %v747 = vsel %vm54, %v693, 0
    %v750 = vsel %vm54, %v696, 0
    %v753 = vsel %vm54, %v699, 0
    %v756 = vsel %vm54, %v702, 0
    %v759 = vsel %vm54, %v705, 0
    %v762 = vsel %vm54, %v708, 0
    %v765 = vsel %vm54, %v711, 0
    %v768 = vsel %vm54, %v714, 0
    %v771 = vsel %vm54, %v717, 0
    %v774 = vsel %vm54, %v720, 0
    %v777 = vsel %vm54, %v723, 0
    %v780 = vsel %vm54, %v726, 0
    %v783 = vsel %vm54, %v729, 0
    %v786 = vsel %vm54, %v732, 0
    %v789 = vsel %vm54, %v735, 0
    %791 = vmatpush.msra.mxu0 0.0
    %792 = vmatpush.msra.mxu0 0.0
    %793 = vmatpush.msra.mxu0 0.0
    %794 = vmatpush.msra.mxu0 0.0
    %795 = vmatpush.msra.mxu0 0.0
    %796 = vmatpush.msra.mxu0 0.0
    %797 = vmatpush.msra.mxu0 0.0
    %798 = vmatpush.msra.mxu0 0.0
    %799 = vmatpush.msra.mxu0 0.0
    %800 = vmatpush.msra.mxu0 0.0
    %801 = vmatpush.msra.mxu0 0.0
    %802 = vmatpush.msra.mxu0 0.0
    %803 = vmatpush.msra.mxu0 %v740
    %804 = vmatpush.msra.mxu0 %v739
    %805 = vmatpush.msra.mxu0 %v738
    %806 = vmatpush.msra.mxu0 %v737
    %807 = vmatmul.f32.gmra.mxu0 %v744
    %v808 = vpop.f32.mrf.mxu0
    %v809 = vadd.f32 %v742, %v808
    %810 = vmatmul.f32.gmra.mxu0 %v747
    %v811 = vpop.f32.mrf.mxu0
    %v812 = vadd.f32 %v742, %v811
    %813 = vmatmul.f32.gmra.mxu0 %v750
    %v814 = vpop.f32.mrf.mxu0
    %v815 = vadd.f32 %v742, %v814
    %816 = vmatmul.f32.gmra.mxu0 %v753
    %v817 = vpop.f32.mrf.mxu0
    %v818 = vadd.f32 %v742, %v817
    %819 = vmatmul.f32.gmra.mxu0 %v756
    %v820 = vpop.f32.mrf.mxu0
    %v821 = vadd.f32 %v742, %v820
    %822 = vmatmul.f32.gmra.mxu0 %v759
    %v823 = vpop.f32.mrf.mxu0
    %v824 = vadd.f32 %v742, %v823
    %825 = vmatmul.f32.gmra.mxu0 %v762
    %v826 = vpop.f32.mrf.mxu0
    %v827 = vadd.f32 %v742, %v826
    %828 = vmatmul.f32.gmra.mxu0 %v765
    %v829 = vpop.f32.mrf.mxu0
    %v830 = vadd.f32 %v742, %v829
    %831 = vmatmul.f32.gmra.mxu0 %v768
    %v832 = vpop.f32.mrf.mxu0
    %v833 = vadd.f32 %v742, %v832
    %834 = vmatmul.f32.gmra.mxu0 %v771
    %v835 = vpop.f32.mrf.mxu0
    %v836 = vadd.f32 %v742, %v835
    %837 = vmatmul.f32.gmra.mxu0 %v774
    %v838 = vpop.f32.mrf.mxu0
    %v839 = vadd.f32 %v742, %v838
    %840 = vmatmul.f32.gmra.mxu0 %v777
    %v841 = vpop.f32.mrf.mxu0
    %v842 = vadd.f32 %v742, %v841
    %843 = vmatmul.f32.gmra.mxu0 %v780
    %v844 = vpop.f32.mrf.mxu0
    %v845 = vadd.f32 %v742, %v844
    %846 = vmatmul.f32.gmra.mxu0 %v783
    %v847 = vpop.f32.mrf.mxu0
    %v848 = vadd.f32 %v742, %v847
    %849 = vmatmul.f32.gmra.mxu0 %v786
    %v850 = vpop.f32.mrf.mxu0
    %v851 = vadd.f32 %v742, %v850
    %852 = vmatmul.f32.gmra.mxu0 %v789
    %v853 = vpop.f32.mrf.mxu0
    %v854 = vadd.f32 %v742, %v853
    %855 = vdwg.mxu0
    %v856 = vadd.f32 %v121, %v809
    %v857 = vadd.f32 %v124, %v812
    %v858 = vadd.f32 %v127, %v815
    %v859 = vadd.f32 %v130, %v818
    %v860 = vadd.f32 %v133, %v821
    %v861 = vadd.f32 %v136, %v824
    %v862 = vadd.f32 %v139, %v827
    %v863 = vadd.f32 %v142, %v830
    %v864 = vadd.f32 %v145, %v833
    %v865 = vadd.f32 %v148, %v836
    %v866 = vadd.f32 %v151, %v839
    %v867 = vadd.f32 %v154, %v842
    %v868 = vadd.f32 %v157, %v845
    %v869 = vadd.f32 %v160, %v848
    %v870 = vadd.f32 %v163, %v851
    %v871 = vadd.f32 %v166, %v854
    %v872 = vld [vmem:[%s2 + $0x2] sm:$0x1]
    %v873 = vld [vmem:[%s2 + $0x3] sm:$0x1]
    %v874 = vsel %vm54, %v856, 0.0
    %875 = vadd.xlane.f32.xlu0 %v874
    %v876 = vpop.xlane.xlu0 %875
    %v877 = vsel %vm54, %v857, 0.0
    %878 = vadd.xlane.f32.xlu0 %v877
    %v879 = vpop.xlane.xlu0 %878
    %v880 = vsel %vm54, %v858, 0.0
    %881 = vadd.xlane.f32.xlu0 %v880
    %v882 = vpop.xlane.xlu0 %881
    %v883 = vsel %vm54, %v859, 0.0
    %884 = vadd.xlane.f32.xlu0 %v883
    %v885 = vpop.xlane.xlu0 %884
    %v886 = vsel %vm54, %v860, 0.0
    %887 = vadd.xlane.f32.xlu0 %v886
    %v888 = vpop.xlane.xlu0 %887
    %v889 = vsel %vm54, %v861, 0.0
    %890 = vadd.xlane.f32.xlu0 %v889
    %v891 = vpop.xlane.xlu0 %890
    %v892 = vsel %vm54, %v862, 0.0
    %893 = vadd.xlane.f32.xlu0 %v892
    %v894 = vpop.xlane.xlu0 %893
    %v895 = vsel %vm54, %v863, 0.0
    %896 = vadd.xlane.f32.xlu0 %v895
    %v897 = vpop.xlane.xlu0 %896
    %v898 = vsel %vm54, %v864, 0.0
    %899 = vadd.xlane.f32.xlu0 %v898
    %v900 = vpop.xlane.xlu0 %899
    %v901 = vsel %vm54, %v865, 0.0
    %902 = vadd.xlane.f32.xlu0 %v901
    %v903 = vpop.xlane.xlu0 %902
    %v904 = vsel %vm54, %v866, 0.0
    %905 = vadd.xlane.f32.xlu0 %v904
    %v906 = vpop.xlane.xlu0 %905
    %v907 = vsel %vm54, %v867, 0.0
    %908 = vadd.xlane.f32.xlu0 %v907
    %v909 = vpop.xlane.xlu0 %908
    %v910 = vsel %vm54, %v868, 0.0
    %911 = vadd.xlane.f32.xlu0 %v910
    %v912 = vpop.xlane.xlu0 %911
    %v913 = vsel %vm54, %v869, 0.0
    %914 = vadd.xlane.f32.xlu0 %v913
    %v915 = vpop.xlane.xlu0 %914
    %v916 = vsel %vm54, %v870, 0.0
    %917 = vadd.xlane.f32.xlu0 %v916
    %v918 = vpop.xlane.xlu0 %917
    %v919 = vsel %vm54, %v871, 0.0
    %920 = vadd.xlane.f32.xlu0 %v919
    %v921 = vpop.xlane.xlu0 %920
    %v922 = vrcp.pop 32.0
    %v923 = vmul.f32 32.0, %v922
    %v924 = vsub.f32 1.0, %v923
    %v925 = vmul.f32 %v922, %v924
    %v926 = vadd.f32 %v922, %v925
    %vm927 = vweird.f32 %v922
    %v928 = vsel %vm927, %v922, %v926
    %v929 = vmul.f32 %v876, %v928
    %v930 = vmul.f32 %v879, %v928
    %v931 = vmul.f32 %v882, %v928
    %v932 = vmul.f32 %v885, %v928
    %v933 = vmul.f32 %v888, %v928
    %v934 = vmul.f32 %v891, %v928
    %v935 = vmul.f32 %v894, %v928
    %v936 = vmul.f32 %v897, %v928
    %v937 = vmul.f32 %v900, %v928
    %v938 = vmul.f32 %v903, %v928
    %v939 = vmul.f32 %v906, %v928
    %v940 = vmul.f32 %v909, %v928
    %v941 = vmul.f32 %v912, %v928
    %v942 = vmul.f32 %v915, %v928
    %v943 = vmul.f32 %v918, %v928
    %v944 = vmul.f32 %v921, %v928
    %v945 = vmul.f32 %v856, %v856
    %v946 = vmul.f32 %v857, %v857
    %v947 = vmul.f32 %v858, %v858
    %v948 = vmul.f32 %v859, %v859
    %v949 = vmul.f32 %v860, %v860
    %v950 = vmul.f32 %v861, %v861
    %v951 = vmul.f32 %v862, %v862
    %v952 = vmul.f32 %v863, %v863
    %v953 = vmul.f32 %v864, %v864
    %v954 = vmul.f32 %v865, %v865
    %v955 = vmul.f32 %v866, %v866
    %v956 = vmul.f32 %v867, %v867
    %v957 = vmul.f32 %v868, %v868
    %v958 = vmul.f32 %v869, %v869
    %v959 = vmul.f32 %v870, %v870
    %v960 = vmul.f32 %v871, %v871
    %v961 = vsel %vm54, %v945, 0.0
    %962 = vadd.xlane.f32.xlu0 %v961
    %v963 = vpop.xlane.xlu0 %962
    %v964 = vsel %vm54, %v946, 0.0
    %965 = vadd.xlane.f32.xlu0 %v964
    %v966 = vpop.xlane.xlu0 %965
    %v967 = vsel %vm54, %v947, 0.0
    %968 = vadd.xlane.f32.xlu0 %v967
    %v969 = vpop.xlane.xlu0 %968
    %v970 = vsel %vm54, %v948, 0.0
    %971 = vadd.xlane.f32.xlu0 %v970
    %v972 = vpop.xlane.xlu0 %971
    %v973 = vsel %vm54, %v949, 0.0
    %974 = vadd.xlane.f32.xlu0 %v973
    %v975 = vpop.xlane.xlu0 %974
    %v976 = vsel %vm54, %v950, 0.0
    %977 = vadd.xlane.f32.xlu0 %v976
    %v978 = vpop.xlane.xlu0 %977
    %v979 = vsel %vm54, %v951, 0.0
    %980 = vadd.xlane.f32.xlu0 %v979
    %v981 = vpop.xlane.xlu0 %980
    %v982 = vsel %vm54, %v952, 0.0
    %983 = vadd.xlane.f32.xlu0 %v982
    %v984 = vpop.xlane.xlu0 %983
    %v985 = vsel %vm54, %v953, 0.0
    %986 = vadd.xlane.f32.xlu0 %v985
    %v987 = vpop.xlane.xlu0 %986
    %v988 = vsel %vm54, %v954, 0.0
    %989 = vadd.xlane.f32.xlu0 %v988
    %v990 = vpop.xlane.xlu0 %989
    %v991 = vsel %vm54, %v955, 0.0
    %992 = vadd.xlane.f32.xlu0 %v991
    %v993 = vpop.xlane.xlu0 %992
    %v994 = vsel %vm54, %v956, 0.0
    %995 = vadd.xlane.f32.xlu0 %v994
    %v996 = vpop.xlane.xlu0 %995
    %v997 = vsel %vm54, %v957, 0.0
    %998 = vadd.xlane.f32.xlu0 %v997
    %v999 = vpop.xlane.xlu0 %998
    %v1000 = vsel %vm54, %v958, 0.0
    %1001 = vadd.xlane.f32.xlu0 %v1000
    %v1002 = vpop.xlane.xlu0 %1001
    %v1003 = vsel %vm54, %v959, 0.0
    %1004 = vadd.xlane.f32.xlu0 %v1003
    %v1005 = vpop.xlane.xlu0 %1004
    %v1006 = vsel %vm54, %v960, 0.0
    %1007 = vadd.xlane.f32.xlu0 %v1006
    %v1008 = vpop.xlane.xlu0 %1007
    %v1009 = vmul.f32 %v963, %v928
    %v1010 = vmul.f32 %v966, %v928
    %v1011 = vmul.f32 %v969, %v928
    %v1012 = vmul.f32 %v972, %v928
    %v1013 = vmul.f32 %v975, %v928
    %v1014 = vmul.f32 %v978, %v928
    %v1015 = vmul.f32 %v981, %v928
    %v1016 = vmul.f32 %v984, %v928
    %v1017 = vmul.f32 %v987, %v928
    %v1018 = vmul.f32 %v990, %v928
    %v1019 = vmul.f32 %v993, %v928
    %v1020 = vmul.f32 %v996, %v928
    %v1021 = vmul.f32 %v999, %v928
    %v1022 = vmul.f32 %v1002, %v928
    %v1023 = vmul.f32 %v1005, %v928
    %v1024 = vmul.f32 %v1008, %v928
    %v1025 = vmul.f32 %v929, %v929
    %v1026 = vmul.f32 %v930, %v930
    %v1027 = vmul.f32 %v931, %v931
    %v1028 = vmul.f32 %v932, %v932
    %v1029 = vmul.f32 %v933, %v933
    %v1030 = vmul.f32 %v934, %v934
    %v1031 = vmul.f32 %v935, %v935
    %v1032 = vmul.f32 %v936, %v936
    %v1033 = vmul.f32 %v937, %v937
    %v1034 = vmul.f32 %v938, %v938
    %v1035 = vmul.f32 %v939, %v939
    %v1036 = vmul.f32 %v940, %v940
    %v1037 = vmul.f32 %v941, %v941
    %v1038 = vmul.f32 %v942, %v942
    %v1039 = vmul.f32 %v943, %v943
    %v1040 = vmul.f32 %v944, %v944
    %v1041 = vsub.f32 %v1009, %v1025
    %v1042 = vsub.f32 %v1010, %v1026
    %v1043 = vsub.f32 %v1011, %v1027
    %v1044 = vsub.f32 %v1012, %v1028
    %v1045 = vsub.f32 %v1013, %v1029
    %v1046 = vsub.f32 %v1014, %v1030
    %v1047 = vsub.f32 %v1015, %v1031
    %v1048 = vsub.f32 %v1016, %v1032
    %v1049 = vsub.f32 %v1017, %v1033
    %v1050 = vsub.f32 %v1018, %v1034
    %v1051 = vsub.f32 %v1019, %v1035
    %v1052 = vsub.f32 %v1020, %v1036
    %v1053 = vsub.f32 %v1021, %v1037
    %v1054 = vsub.f32 %v1022, %v1038
    %v1055 = vsub.f32 %v1023, %v1039
    %v1056 = vsub.f32 %v1024, %v1040
    %v1057 = vsub.f32 %v856, %v929
    %v1058 = vsub.f32 %v857, %v930
    %v1059 = vsub.f32 %v858, %v931
    %v1060 = vsub.f32 %v859, %v932
    %v1061 = vsub.f32 %v860, %v933
    %v1062 = vsub.f32 %v861, %v934
    %v1063 = vsub.f32 %v862, %v935
    %v1064 = vsub.f32 %v863, %v936
    %v1065 = vsub.f32 %v864, %v937
    %v1066 = vsub.f32 %v865, %v938
    %v1067 = vsub.f32 %v866, %v939
    %v1068 = vsub.f32 %v867, %v940
    %v1069 = vsub.f32 %v868, %v941
    %v1070 = vsub.f32 %v869, %v942
    %v1071 = vsub.f32 %v870, %v943
    %v1072 = vsub.f32 %v871, %v944
    %v1073 = vadd.f32 %v1041, 1e-05
    %v1074 = vadd.f32 %v1042, 1e-05
    %v1075 = vadd.f32 %v1043, 1e-05
    %v1076 = vadd.f32 %v1044, 1e-05
    %v1077 = vadd.f32 %v1045, 1e-05
    %v1078 = vadd.f32 %v1046, 1e-05
    %v1079 = vadd.f32 %v1047, 1e-05
    %v1080 = vadd.f32 %v1048, 1e-05
    %v1081 = vadd.f32 %v1049, 1e-05
    %v1082 = vadd.f32 %v1050, 1e-05
    %v1083 = vadd.f32 %v1051, 1e-05
    %v1084 = vadd.f32 %v1052, 1e-05
    %v1085 = vadd.f32 %v1053, 1e-05
    %v1086 = vadd.f32 %v1054, 1e-05
    %v1087 = vadd.f32 %v1055, 1e-05
    %v1088 = vadd.f32 %v1056, 1e-05
    %v1089 = vrsqrt.pop %v1073
    %v1090 = vmul.f32 %v1089, %v1073
    %v1091 = vmul.f32 %v1090, %v1089
    %v1092 = vmul.f32 0.5, %v1091
    %v1093 = vsub.f32 1.5, %v1092
    %v1094 = vmul.f32 %v1089, %v1093
    %vm1095 = vweird.f32 %v1073
    %vm1096 = vweird.f32 %v1089
    %vm1097 = vmor %vm1095, %vm1096
    %v1098 = vsel %vm1097, %v1089, %v1094
    %v1099 = vrsqrt.pop %v1074
    %v1100 = vmul.f32 %v1099, %v1074
    %v1101 = vmul.f32 %v1100, %v1099
    %v1102 = vmul.f32 0.5, %v1101
    %v1103 = vsub.f32 1.5, %v1102
    %v1104 = vmul.f32 %v1099, %v1103
    %vm1105 = vweird.f32 %v1074
    %vm1106 = vweird.f32 %v1099
    %vm1107 = vmor %vm1105, %vm1106
    %v1108 = vsel %vm1107, %v1099, %v1104
    %v1109 = vrsqrt.pop %v1075
    %v1110 = vmul.f32 %v1109, %v1075
    %v1111 = vmul.f32 %v1110, %v1109
    %v1112 = vmul.f32 0.5, %v1111
    %v1113 = vsub.f32 1.5, %v1112
    %v1114 = vmul.f32 %v1109, %v1113
    %vm1115 = vweird.f32 %v1075
    %vm1116 = vweird.f32 %v1109
    %vm1117 = vmor %vm1115, %vm1116
    %v1118 = vsel %vm1117, %v1109, %v1114
    %v1119 = vrsqrt.pop %v1076
    %v1120 = vmul.f32 %v1119, %v1076
    %v1121 = vmul.f32 %v1120, %v1119
    %v1122 = vmul.f32 0.5, %v1121
    %v1123 = vsub.f32 1.5, %v1122
    %v1124 = vmul.f32 %v1119, %v1123
    %vm1125 = vweird.f32 %v1076
    %vm1126 = vweird.f32 %v1119
    %vm1127 = vmor %vm1125, %vm1126
    %v1128 = vsel %vm1127, %v1119, %v1124
    %v1129 = vrsqrt.pop %v1077
    %v1130 = vmul.f32 %v1129, %v1077
    %v1131 = vmul.f32 %v1130, %v1129
    %v1132 = vmul.f32 0.5, %v1131
    %v1133 = vsub.f32 1.5, %v1132
    %v1134 = vmul.f32 %v1129, %v1133
    %vm1135 = vweird.f32 %v1077
    %vm1136 = vweird.f32 %v1129
    %vm1137 = vmor %vm1135, %vm1136
    %v1138 = vsel %vm1137, %v1129, %v1134
    %v1139 = vrsqrt.pop %v1078
    %v1140 = vmul.f32 %v1139, %v1078
    %v1141 = vmul.f32 %v1140, %v1139
    %v1142 = vmul.f32 0.5, %v1141
    %v1143 = vsub.f32 1.5, %v1142
    %v1144 = vmul.f32 %v1139, %v1143
    %vm1145 = vweird.f32 %v1078
    %vm1146 = vweird.f32 %v1139
    %vm1147 = vmor %vm1145, %vm1146
    %v1148 = vsel %vm1147, %v1139, %v1144
    %v1149 = vrsqrt.pop %v1079
    %v1150 = vmul.f32 %v1149, %v1079
    %v1151 = vmul.f32 %v1150, %v1149
    %v1152 = vmul.f32 0.5, %v1151
    %v1153 = vsub.f32 1.5, %v1152
    %v1154 = vmul.f32 %v1149, %v1153
    %vm1155 = vweird.f32 %v1079
    %vm1156 = vweird.f32 %v1149
    %vm1157 = vmor %vm1155, %vm1156
    %v1158 = vsel %vm1157, %v1149, %v1154
    %v1159 = vrsqrt.pop %v1080
    %v1160 = vmul.f32 %v1159, %v1080
    %v1161 = vmul.f32 %v1160, %v1159
    %v1162 = vmul.f32 0.5, %v1161
    %v1163 = vsub.f32 1.5, %v1162
    %v1164 = vmul.f32 %v1159, %v1163
    %vm1165 = vweird.f32 %v1080
    %vm1166 = vweird.f32 %v1159
    %vm1167 = vmor %vm1165, %vm1166
    %v1168 = vsel %vm1167, %v1159, %v1164
    %v1169 = vrsqrt.pop %v1081
    %v1170 = vmul.f32 %v1169, %v1081
    %v1171 = vmul.f32 %v1170, %v1169
    %v1172 = vmul.f32 0.5, %v1171
    %v1173 = vsub.f32 1.5, %v1172
    %v1174 = vmul.f32 %v1169, %v1173
    %vm1175 = vweird.f32 %v1081
    %vm1176 = vweird.f32 %v1169
    %vm1177 = vmor %vm1175, %vm1176
    %v1178 = vsel %vm1177, %v1169, %v1174
    %v1179 = vrsqrt.pop %v1082
    %v1180 = vmul.f32 %v1179, %v1082
    %v1181 = vmul.f32 %v1180, %v1179
    %v1182 = vmul.f32 0.5, %v1181
    %v1183 = vsub.f32 1.5, %v1182
    %v1184 = vmul.f32 %v1179, %v1183
    %vm1185 = vweird.f32 %v1082
    %vm1186 = vweird.f32 %v1179
    %vm1187 = vmor %vm1185, %vm1186
    %v1188 = vsel %vm1187, %v1179, %v1184
    %v1189 = vrsqrt.pop %v1083
    %v1190 = vmul.f32 %v1189, %v1083
    %v1191 = vmul.f32 %v1190, %v1189
    %v1192 = vmul.f32 0.5, %v1191
    %v1193 = vsub.f32 1.5, %v1192
    %v1194 = vmul.f32 %v1189, %v1193
    %vm1195 = vweird.f32 %v1083
    %vm1196 = vweird.f32 %v1189
    %vm1197 = vmor %vm1195, %vm1196
    %v1198 = vsel %vm1197, %v1189, %v1194
    %v1199 = vrsqrt.pop %v1084
    %v1200 = vmul.f32 %v1199, %v1084
    %v1201 = vmul.f32 %v1200, %v1199
    %v1202 = vmul.f32 0.5, %v1201
    %v1203 = vsub.f32 1.5, %v1202
    %v1204 = vmul.f32 %v1199, %v1203
    %vm1205 = vweird.f32 %v1084
    %vm1206 = vweird.f32 %v1199
    %vm1207 = vmor %vm1205, %vm1206
    %v1208 = vsel %vm1207, %v1199, %v1204
    %v1209 = vrsqrt.pop %v1085
    %v1210 = vmul.f32 %v1209, %v1085
    %v1211 = vmul.f32 %v1210, %v1209
    %v1212 = vmul.f32 0.5, %v1211
    %v1213 = vsub.f32 1.5, %v1212
    %v1214 = vmul.f32 %v1209, %v1213
    %vm1215 = vweird.f32 %v1085
    %vm1216 = vweird.f32 %v1209
    %vm1217 = vmor %vm1215, %vm1216
    %v1218 = vsel %vm1217, %v1209, %v1214
    %v1219 = vrsqrt.pop %v1086
    %v1220 = vmul.f32 %v1219, %v1086
    %v1221 = vmul.f32 %v1220, %v1219
    %v1222 = vmul.f32 0.5, %v1221
    %v1223 = vsub.f32 1.5, %v1222
    %v1224 = vmul.f32 %v1219, %v1223
    %vm1225 = vweird.f32 %v1086
    %vm1226 = vweird.f32 %v1219
    %vm1227 = vmor %vm1225, %vm1226
    %v1228 = vsel %vm1227, %v1219, %v1224
    %v1229 = vrsqrt.pop %v1087
    %v1230 = vmul.f32 %v1229, %v1087
    %v1231 = vmul.f32 %v1230, %v1229
    %v1232 = vmul.f32 0.5, %v1231
    %v1233 = vsub.f32 1.5, %v1232
    %v1234 = vmul.f32 %v1229, %v1233
    %vm1235 = vweird.f32 %v1087
    %vm1236 = vweird.f32 %v1229
    %vm1237 = vmor %vm1235, %vm1236
    %v1238 = vsel %vm1237, %v1229, %v1234
    %v1239 = vrsqrt.pop %v1088
    %v1240 = vmul.f32 %v1239, %v1088
    %v1241 = vmul.f32 %v1240, %v1239
    %v1242 = vmul.f32 0.5, %v1241
    %v1243 = vsub.f32 1.5, %v1242
    %v1244 = vmul.f32 %v1239, %v1243
    %vm1245 = vweird.f32 %v1088
    %vm1246 = vweird.f32 %v1239
    %vm1247 = vmor %vm1245, %vm1246
    %v1248 = vsel %vm1247, %v1239, %v1244
    %v1249 = vmul.f32 %v1057, %v1098
    %v1250 = vmul.f32 %v1058, %v1108
    %v1251 = vmul.f32 %v1059, %v1118
    %v1252 = vmul.f32 %v1060, %v1128
    %v1253 = vmul.f32 %v1061, %v1138
    %v1254 = vmul.f32 %v1062, %v1148
    %v1255 = vmul.f32 %v1063, %v1158
    %v1256 = vmul.f32 %v1064, %v1168
    %v1257 = vmul.f32 %v1065, %v1178
    %v1258 = vmul.f32 %v1066, %v1188
    %v1259 = vmul.f32 %v1067, %v1198
    %v1260 = vmul.f32 %v1068, %v1208
    %v1261 = vmul.f32 %v1069, %v1218
    %v1262 = vmul.f32 %v1070, %v1228
    %v1263 = vmul.f32 %v1071, %v1238
    %v1264 = vmul.f32 %v1072, %v1248
    %v1265 = vperm.slane %v872, 0
    %v1266 = vmul.f32 %v1249, %v1265
    %v1267 = vmul.f32 %v1250, %v1265
    %v1268 = vmul.f32 %v1251, %v1265
    %v1269 = vmul.f32 %v1252, %v1265
    %v1270 = vmul.f32 %v1253, %v1265
    %v1271 = vmul.f32 %v1254, %v1265
    %v1272 = vmul.f32 %v1255, %v1265
    %v1273 = vmul.f32 %v1256, %v1265
    %v1274 = vmul.f32 %v1257, %v1265
    %v1275 = vmul.f32 %v1258, %v1265
    %v1276 = vmul.f32 %v1259, %v1265
    %v1277 = vmul.f32 %v1260, %v1265
    %v1278 = vmul.f32 %v1261, %v1265
    %v1279 = vmul.f32 %v1262, %v1265
    %v1280 = vmul.f32 %v1263, %v1265
    %v1281 = vmul.f32 %v1264, %v1265
    %v1282 = vperm.slane %v873, 0
    %v1283 = vadd.f32 %v1266, %v1282
    %v1284 = vadd.f32 %v1267, %v1282
    %v1285 = vadd.f32 %v1268, %v1282
    %v1286 = vadd.f32 %v1269, %v1282
    %v1287 = vadd.f32 %v1270, %v1282
    %v1288 = vadd.f32 %v1271, %v1282
    %v1289 = vadd.f32 %v1272, %v1282
    %v1290 = vadd.f32 %v1273, %v1282
    %v1291 = vadd.f32 %v1274, %v1282
    %v1292 = vadd.f32 %v1275, %v1282
    %v1293 = vadd.f32 %v1276, %v1282
    %v1294 = vadd.f32 %v1277, %v1282
    %v1295 = vadd.f32 %v1278, %v1282
    %v1296 = vadd.f32 %v1279, %v1282
    %v1297 = vadd.f32 %v1280, %v1282
    %v1298 = vadd.f32 %v1281, %v1282
    %v1299 = vld [vmem:[#allocation2 + $0x18] sm:$0xff]
    %v1300 = vld [vmem:[#allocation2 + $0x48] sm:$0xff]
    %v1301 = vld [vmem:[#allocation2 + $0x78] sm:$0xff]
    %v1302 = vld [vmem:[#allocation2 + $0xa8] sm:$0xff]
    %v1303 = vld [vmem:[#allocation2 + $0x20] sm:$0xff]
    %v1304 = vld [vmem:[#allocation2 + $0x50] sm:$0xff]
    %v1305 = vld [vmem:[#allocation2 + $0x80] sm:$0xff]
    %v1306 = vld [vmem:[#allocation2 + $0xb0] sm:$0xff]
    %v1307 = vld [vmem:[%s2 + $0x4] sm:$0x1]
    %v1308 = vperm.slane %v1307, 0
    %v1310 = vsel %vm54, %v1283, 0
    %v1313 = vsel %vm54, %v1284, 0
    %v1316 = vsel %vm54, %v1285, 0
    %v1319 = vsel %vm54, %v1286, 0
    %v1322 = vsel %vm54, %v1287, 0
    %v1325 = vsel %vm54, %v1288, 0
    %v1328 = vsel %vm54, %v1289, 0
    %v1331 = vsel %vm54, %v1290, 0
    %v1334 = vsel %vm54, %v1291, 0
    %v1337 = vsel %vm54, %v1292, 0
    %v1340 = vsel %vm54, %v1293, 0
    %v1343 = vsel %vm54, %v1294, 0
    %v1346 = vsel %vm54, %v1295, 0
    %v1349 = vsel %vm54, %v1296, 0
    %v1352 = vsel %vm54, %v1297, 0
    %v1355 = vsel %vm54, %v1298, 0
    %1357 = vmatpush.msra.mxu0 0.0
    %1358 = vmatpush.msra.mxu0 0.0
    %1359 = vmatpush.msra.mxu0 0.0
    %1360 = vmatpush.msra.mxu0 0.0
    %1361 = vmatpush.msra.mxu0 0.0
    %1362 = vmatpush.msra.mxu0 0.0
    %1363 = vmatpush.msra.mxu0 0.0
    %1364 = vmatpush.msra.mxu0 0.0
    %1365 = vmatpush.msra.mxu0 0.0
    %1366 = vmatpush.msra.mxu0 0.0
    %1367 = vmatpush.msra.mxu0 0.0
    %1368 = vmatpush.msra.mxu0 0.0
    %1369 = vmatpush.msra.mxu0 %v1302
    %1370 = vmatpush.msra.mxu0 %v1301
    %1371 = vmatpush.msra.mxu0 %v1300
    %1372 = vmatpush.msra.mxu0 %v1299
    %1373 = vmatmul.f32.gmra.mxu0 %v1310
    %v1374 = vpop.f32.mrf.mxu0
    %v1375 = vadd.f32 %v1308, %v1374
    %1376 = vmatmul.f32.gmra.mxu0 %v1313
    %v1377 = vpop.f32.mrf.mxu0
    %v1378 = vadd.f32 %v1308, %v1377
    %1379 = vmatmul.f32.gmra.mxu0 %v1316
    %v1380 = vpop.f32.mrf.mxu0
    %v1381 = vadd.f32 %v1308, %v1380
    %1382 = vmatmul.f32.gmra.mxu0 %v1319
    %v1383 = vpop.f32.mrf.mxu0
    %v1384 = vadd.f32 %v1308, %v1383
    %1385 = vmatmul.f32.gmra.mxu0 %v1322
    %v1386 = vpop.f32.mrf.mxu0
    %v1387 = vadd.f32 %v1308, %v1386
    %1388 = vmatmul.f32.gmra.mxu0 %v1325
    %v1389 = vpop.f32.mrf.mxu0
    %v1390 = vadd.f32 %v1308, %v1389
    %1391 = vmatmul.f32.gmra.mxu0 %v1328
    %v1392 = vpop.f32.mrf.mxu0
    %v1393 = vadd.f32 %v1308, %v1392
    %1394 = vmatmul.f32.gmra.mxu0 %v1331
    %v1395 = vpop.f32.mrf.mxu0
    %v1396 = vadd.f32 %v1308, %v1395
    %1397 = vmatmul.f32.gmra.mxu0 %v1334
    %v1398 = vpop.f32.mrf.mxu0
    %v1399 = vadd.f32 %v1308, %v1398
    %1400 = vmatmul.f32.gmra.mxu0 %v1337
    %v1401 = vpop.f32.mrf.mxu0
    %v1402 = vadd.f32 %v1308, %v1401
    %1403 = vmatmul.f32.gmra.mxu0 %v1340
    %v1404 = vpop.f32.mrf.mxu0
    %v1405 = vadd.f32 %v1308, %v1404
    %1406 = vmatmul.f32.gmra.mxu0 %v1343
    %v1407 = vpop.f32.mrf.mxu0
    %v1408 = vadd.f32 %v1308, %v1407
    %1409 = vmatmul.f32.gmra.mxu0 %v1346
    %v1410 = vpop.f32.mrf.mxu0
    %v1411 = vadd.f32 %v1308, %v1410
    %1412 = vmatmul.f32.gmra.mxu0 %v1349
    %v1413 = vpop.f32.mrf.mxu0
    %v1414 = vadd.f32 %v1308, %v1413
    %1415 = vmatmul.f32.gmra.mxu0 %v1352
    %v1416 = vpop.f32.mrf.mxu0
    %v1417 = vadd.f32 %v1308, %v1416
    %1418 = vmatmul.f32.gmra.mxu0 %v1355
    %v1419 = vpop.f32.mrf.mxu0
    %v1420 = vadd.f32 %v1308, %v1419
    %1421 = vdwg.mxu0
    %v1422 = vmax.f32 %v1375, 0.0
    %v1423 = vmax.f32 %v1378, 0.0
    %v1424 = vmax.f32 %v1381, 0.0
    %v1425 = vmax.f32 %v1384, 0.0
    %v1426 = vmax.f32 %v1387, 0.0
    %v1427 = vmax.f32 %v1390, 0.0
    %v1428 = vmax.f32 %v1393, 0.0
    %v1429 = vmax.f32 %v1396, 0.0
    %v1430 = vmax.f32 %v1399, 0.0
    %v1431 = vmax.f32 %v1402, 0.0
    %v1432 = vmax.f32 %v1405, 0.0
    %v1433 = vmax.f32 %v1408, 0.0
    %v1434 = vmax.f32 %v1411, 0.0
    %v1435 = vmax.f32 %v1414, 0.0
    %v1436 = vmax.f32 %v1417, 0.0
    %v1437 = vmax.f32 %v1420, 0.0
    %v1438 = vld [vmem:[%s2 + $0x5] sm:$0x1]
    %v1439 = vperm.slane %v1438, 0
    %v1441 = vsel %vm54, %v1422, 0
    %v1444 = vsel %vm54, %v1423, 0
    %v1447 = vsel %vm54, %v1424, 0
    %v1450 = vsel %vm54, %v1425, 0
    %v1453 = vsel %vm54, %v1426, 0
    %v1456 = vsel %vm54, %v1427, 0
    %v1459 = vsel %vm54, %v1428, 0
    %v1462 = vsel %vm54, %v1429, 0
    %v1465 = vsel %vm54, %v1430, 0
    %v1468 = vsel %vm54, %v1431, 0
    %v1471 = vsel %vm54, %v1432, 0
    %v1474 = vsel %vm54, %v1433, 0
    %v1477 = vsel %vm54, %v1434, 0
    %v1480 = vsel %vm54, %v1435, 0
    %v1483 = vsel %vm54, %v1436, 0
    %v1486 = vsel %vm54, %v1437, 0
    %1488 = vmatpush.msra.mxu0 0.0
    %1489 = vmatpush.msra.mxu0 0.0
    %1490 = vmatpush.msra.mxu0 0.0
    %1491 = vmatpush.msra.mxu0 0.0
    %1492 = vmatpush.msra.mxu0 0.0
    %1493 = vmatpush.msra.mxu0 0.0
    %1494 = vmatpush.msra.mxu0 0.0
    %1495 = vmatpush.msra.mxu0 0.0
    %1496 = vmatpush.msra.mxu0 0.0
    %1497 = vmatpush.msra.mxu0 0.0
    %1498 = vmatpush.msra.mxu0 0.0
    %1499 = vmatpush.msra.mxu0 0.0
    %1500 = vmatpush.msra.mxu0 %v1306
    %1501 = vmatpush.msra.mxu0 %v1305
    %1502 = vmatpush.msra.mxu0 %v1304
    %1503 = vmatpush.msra.mxu0 %v1303
    %1504 = vmatmul.f32.gmra.mxu0 %v1441
    %v1505 = vpop.f32.mrf.mxu0
    %v1506 = vadd.f32 %v1439, %v1505
    %1507 = vmatmul.f32.gmra.mxu0 %v1444
    %v1508 = vpop.f32.mrf.mxu0
    %v1509 = vadd.f32 %v1439, %v1508
    %1510 = vmatmul.f32.gmra.mxu0 %v1447
    %v1511 = vpop.f32.mrf.mxu0
    %v1512 = vadd.f32 %v1439, %v1511
    %1513 = vmatmul.f32.gmra.mxu0 %v1450
    %v1514 = vpop.f32.mrf.mxu0
    %v1515 = vadd.f32 %v1439, %v1514
    %1516 = vmatmul.f32.gmra.mxu0 %v1453
    %v1517 = vpop.f32.mrf.mxu0
    %v1518 = vadd.f32 %v1439, %v1517
    %1519 = vmatmul.f32.gmra.mxu0 %v1456
    %v1520 = vpop.f32.mrf.mxu0
    %v1521 = vadd.f32 %v1439, %v1520
    %1522 = vmatmul.f32.gmra.mxu0 %v1459
    %v1523 = vpop.f32.mrf.mxu0
    %v1524 = vadd.f32 %v1439, %v1523
    %1525 = vmatmul.f32.gmra.mxu0 %v1462
    %v1526 = vpop.f32.mrf.mxu0
    %v1527 = vadd.f32 %v1439, %v1526
    %1528 = vmatmul.f32.gmra.mxu0 %v1465
    %v1529 = vpop.f32.mrf.mxu0
    %v1530 = vadd.f32 %v1439, %v1529
    %1531 = vmatmul.f32.gmra.mxu0 %v1468
    %v1532 = vpop.f32.mrf.mxu0
    %v1533 = vadd.f32 %v1439, %v1532
    %1534 = vmatmul.f32.gmra.mxu0 %v1471
    %v1535 = vpop.f32.mrf.mxu0
    %v1536 = vadd.f32 %v1439, %v1535
    %1537 = vmatmul.f32.gmra.mxu0 %v1474
    %v1538 = vpop.f32.mrf.mxu0
    %v1539 = vadd.f32 %v1439, %v1538
    %1540 = vmatmul.f32.gmra.mxu0 %v1477
    %v1541 = vpop.f32.mrf.mxu0
    %v1542 = vadd.f32 %v1439, %v1541
    %1543 = vmatmul.f32.gmra.mxu0 %v1480
    %v1544 = vpop.f32.mrf.mxu0
    %v1545 = vadd.f32 %v1439, %v1544
    %1546 = vmatmul.f32.gmra.mxu0 %v1483
    %v1547 = vpop.f32.mrf.mxu0
    %v1548 = vadd.f32 %v1439, %v1547
    %1549 = vmatmul.f32.gmra.mxu0 %v1486
    %v1550 = vpop.f32.mrf.mxu0
    %v1551 = vadd.f32 %v1439, %v1550
    %1552 = vdwg.mxu0
    %v1553 = vadd.f32 %v1283, %v1506
    %v1554 = vadd.f32 %v1284, %v1509
    %v1555 = vadd.f32 %v1285, %v1512
    %v1556 = vadd.f32 %v1286, %v1515
    %v1557 = vadd.f32 %v1287, %v1518
    %v1558 = vadd.f32 %v1288, %v1521
    %v1559 = vadd.f32 %v1289, %v1524
    %v1560 = vadd.f32 %v1290, %v1527
    %v1561 = vadd.f32 %v1291, %v1530
    %v1562 = vadd.f32 %v1292, %v1533
    %v1563 = vadd.f32 %v1293, %v1536
    %v1564 = vadd.f32 %v1294, %v1539
    %v1565 = vadd.f32 %v1295, %v1542
    %v1566 = vadd.f32 %v1296, %v1545
    %v1567 = vadd.f32 %v1297, %v1548
    %v1568 = vadd.f32 %v1298, %v1551
    %v1569 = vld [vmem:[%s2 + $0x6] sm:$0x1]
    %v1570 = vld [vmem:[%s2 + $0x7] sm:$0x1]
    %v1571 = vsel %vm54, %v1553, 0.0
    %1572 = vadd.xlane.f32.xlu0 %v1571
    %v1573 = vpop.xlane.xlu0 %1572
    %v1574 = vsel %vm54, %v1554, 0.0
    %1575 = vadd.xlane.f32.xlu0 %v1574
    %v1576 = vpop.xlane.xlu0 %1575
    %v1577 = vsel %vm54, %v1555, 0.0
    %1578 = vadd.xlane.f32.xlu0 %v1577
    %v1579 = vpop.xlane.xlu0 %1578
    %v1580 = vsel %vm54, %v1556, 0.0
    %1581 = vadd.xlane.f32.xlu0 %v1580
    %v1582 = vpop.xlane.xlu0 %1581
    %v1583 = vsel %vm54, %v1557, 0.0
    %1584 = vadd.xlane.f32.xlu0 %v1583
    %v1585 = vpop.xlane.xlu0 %1584
    %v1586 = vsel %vm54, %v1558, 0.0
    %1587 = vadd.xlane.f32.xlu0 %v1586
    %v1588 = vpop.xlane.xlu0 %1587
    %v1589 = vsel %vm54, %v1559, 0.0
    %1590 = vadd.xlane.f32.xlu0 %v1589
    %v1591 = vpop.xlane.xlu0 %1590
    %v1592 = vsel %vm54, %v1560, 0.0
    %1593 = vadd.xlane.f32.xlu0 %v1592
    %v1594 = vpop.xlane.xlu0 %1593
    %v1595 = vsel %vm54, %v1561, 0.0
    %1596 = vadd.xlane.f32.xlu0 %v1595
    %v1597 = vpop.xlane.xlu0 %1596
    %v1598 = vsel %vm54, %v1562, 0.0
    %1599 = vadd.xlane.f32.xlu0 %v1598
    %v1600 = vpop.xlane.xlu0 %1599
    %v1601 = vsel %vm54, %v1563, 0.0
    %1602 = vadd.xlane.f32.xlu0 %v1601
    %v1603 = vpop.xlane.xlu0 %1602
    %v1604 = vsel %vm54, %v1564, 0.0
    %1605 = vadd.xlane.f32.xlu0 %v1604
    %v1606 = vpop.xlane.xlu0 %1605
    %v1607 = vsel %vm54, %v1565, 0.0
    %1608 = vadd.xlane.f32.xlu0 %v1607
    %v1609 = vpop.xlane.xlu0 %1608
    %v1610 = vsel %vm54, %v1566, 0.0
    %1611 = vadd.xlane.f32.xlu0 %v1610
    %v1612 = vpop.xlane.xlu0 %1611
    %v1613 = vsel %vm54, %v1567, 0.0
    %1614 = vadd.xlane.f32.xlu0 %v1613
    %v1615 = vpop.xlane.xlu0 %1614
    %v1616 = vsel %vm54, %v1568, 0.0
    %1617 = vadd.xlane.f32.xlu0 %v1616
    %v1618 = vpop.xlane.xlu0 %1617
    %v1619 = vmul.f32 %v1573, %v928
    %v1620 = vmul.f32 %v1576, %v928
    %v1621 = vmul.f32 %v1579, %v928
    %v1622 = vmul.f32 %v1582, %v928
    %v1623 = vmul.f32 %v1585, %v928
    %v1624 = vmul.f32 %v1588, %v928
    %v1625 = vmul.f32 %v1591, %v928
    %v1626 = vmul.f32 %v1594, %v928
    %v1627 = vmul.f32 %v1597, %v928
    %v1628 = vmul.f32 %v1600, %v928
    %v1629 = vmul.f32 %v1603, %v928
    %v1630 = vmul.f32 %v1606, %v928
    %v1631 = vmul.f32 %v1609, %v928
    %v1632 = vmul.f32 %v1612, %v928
    %v1633 = vmul.f32 %v1615, %v928
    %v1634 = vmul.f32 %v1618, %v928
    %v1635 = vmul.f32 %v1553, %v1553
    %v1636 = vmul.f32 %v1554, %v1554
    %v1637 = vmul.f32 %v1555, %v1555
    %v1638 = vmul.f32 %v1556, %v1556
    %v1639 = vmul.f32 %v1557, %v1557
    %v1640 = vmul.f32 %v1558, %v1558
    %v1641 = vmul.f32 %v1559, %v1559
    %v1642 = vmul.f32 %v1560, %v1560
    %v1643 = vmul.f32 %v1561, %v1561
    %v1644 = vmul.f32 %v1562, %v1562
    %v1645 = vmul.f32 %v1563, %v1563
    %v1646 = vmul.f32 %v1564, %v1564
    %v1647 = vmul.f32 %v1565, %v1565
    %v1648 = vmul.f32 %v1566, %v1566
    %v1649 = vmul.f32 %v1567, %v1567
    %v1650 = vmul.f32 %v1568, %v1568
    %v1651 = vsel %vm54, %v1635, 0.0
    %1652 = vadd.xlane.f32.xlu0 %v1651
    %v1653 = vpop.xlane.xlu0 %1652
    %v1654 = vsel %vm54, %v1636, 0.0
    %1655 = vadd.xlane.f32.xlu0 %v1654
    %v1656 = vpop.xlane.xlu0 %1655
    %v1657 = vsel %vm54, %v1637, 0.0
    %1658 = vadd.xlane.f32.xlu0 %v1657
    %v1659 = vpop.xlane.xlu0 %1658
    %v1660 = vsel %vm54, %v1638, 0.0
    %1661 = vadd.xlane.f32.xlu0 %v1660
    %v1662 = vpop.xlane.xlu0 %1661
    %v1663 = vsel %vm54, %v1639, 0.0
    %1664 = vadd.xlane.f32.xlu0 %v1663
    %v1665 = vpop.xlane.xlu0 %1664
    %v1666 = vsel %vm54, %v1640, 0.0
    %1667 = vadd.xlane.f32.xlu0 %v1666
    %v1668 = vpop.xlane.xlu0 %1667
    %v1669 = vsel %vm54, %v1641, 0.0
    %1670 = vadd.xlane.f32.xlu0 %v1669
    %v1671 = vpop.xlane.xlu0 %1670
    %v1672 = vsel %vm54, %v1642, 0.0
    %1673 = vadd.xlane.f32.xlu0 %v1672
    %v1674 = vpop.xlane.xlu0 %1673
    %v1675 = vsel %vm54, %v1643, 0.0
    %1676 = vadd.xlane.f32.xlu0 %v1675
    %v1677 = vpop.xlane.xlu0 %1676
    %v1678 = vsel %vm54, %v1644, 0.0
    %1679 = vadd.xlane.f32.xlu0 %v1678
    %v1680 = vpop.xlane.xlu0 %1679
    %v1681 = vsel %vm54, %v1645, 0.0
    %1682 = vadd.xlane.f32.xlu0 %v1681
    %v1683 = vpop.xlane.xlu0 %1682
    %v1684 = vsel %vm54, %v1646, 0.0
    %1685 = vadd.xlane.f32.xlu0 %v1684
    %v1686 = vpop.xlane.xlu0 %1685
    %v1687 = vsel %vm54, %v1647, 0.0
    %1688 = vadd.xlane.f32.xlu0 %v1687
    %v1689 = vpop.xlane.xlu0 %1688
    %v1690 = vsel %vm54, %v1648, 0.0
    %1691 = vadd.xlane.f32.xlu0 %v1690
    %v1692 = vpop.xlane.xlu0 %1691
    %v1693 = vsel %vm54, %v1649, 0.0
    %1694 = vadd.xlane.f32.xlu0 %v1693
    %v1695 = vpop.xlane.xlu0 %1694
    %v1696 = vsel %vm54, %v1650, 0.0
    %1697 = vadd.xlane.f32.xlu0 %v1696
    %v1698 = vpop.xlane.xlu0 %1697
    %v1699 = vmul.f32 %v1653, %v928
    %v1700 = vmul.f32 %v1656, %v928
    %v1701 = vmul.f32 %v1659, %v928
    %v1702 = vmul.f32 %v1662, %v928
    %v1703 = vmul.f32 %v1665, %v928
    %v1704 = vmul.f32 %v1668, %v928
    %v1705 = vmul.f32 %v1671, %v928
    %v1706 = vmul.f32 %v1674, %v928
    %v1707 = vmul.f32 %v1677, %v928
    %v1708 = vmul.f32 %v1680, %v928
    %v1709 = vmul.f32 %v1683, %v928
    %v1710 = vmul.f32 %v1686, %v928
    %v1711 = vmul.f32 %v1689, %v928
    %v1712 = vmul.f32 %v1692, %v928
    %v1713 = vmul.f32 %v1695, %v928
    %v1714 = vmul.f32 %v1698, %v928
    %v1715 = vmul.f32 %v1619, %v1619
    %v1716 = vmul.f32 %v1620, %v1620
    %v1717 = vmul.f32 %v1621, %v1621
    %v1718 = vmul.f32 %v1622, %v1622
    %v1719 = vmul.f32 %v1623, %v1623
    %v1720 = vmul.f32 %v1624, %v1624
    %v1721 = vmul.f32 %v1625, %v1625
    %v1722 = vmul.f32 %v1626, %v1626
    %v1723 = vmul.f32 %v1627, %v1627
    %v1724 = vmul.f32 %v1628, %v1628
    %v1725 = vmul.f32 %v1629, %v1629
    %v1726 = vmul.f32 %v1630, %v1630
    %v1727 = vmul.f32 %v1631, %v1631
    %v1728 = vmul.f32 %v1632, %v1632
    %v1729 = vmul.f32 %v1633, %v1633
    %v1730 = vmul.f32 %v1634, %v1634
    %v1731 = vsub.f32 %v1699, %v1715
    %v1732 = vsub.f32 %v1700, %v1716
    %v1733 = vsub.f32 %v1701, %v1717
    %v1734 = vsub.f32 %v1702, %v1718
    %v1735 = vsub.f32 %v1703, %v1719
    %v1736 = vsub.f32 %v1704, %v1720
    %v1737 = vsub.f32 %v1705, %v1721
    %v1738 = vsub.f32 %v1706, %v1722
    %v1739 = vsub.f32 %v1707, %v1723
    %v1740 = vsub.f32 %v1708, %v1724
    %v1741 = vsub.f32 %v1709, %v1725
    %v1742 = vsub.f32 %v1710, %v1726
    %v1743 = vsub.f32 %v1711, %v1727
    %v1744 = vsub.f32 %v1712, %v1728
    %v1745 = vsub.f32 %v1713, %v1729
    %v1746 = vsub.f32 %v1714, %v1730
    %v1747 = vsub.f32 %v1553, %v1619
    %v1748 = vsub.f32 %v1554, %v1620
    %v1749 = vsub.f32 %v1555, %v1621
    %v1750 = vsub.f32 %v1556, %v1622
    %v1751 = vsub.f32 %v1557, %v1623
    %v1752 = vsub.f32 %v1558, %v1624
    %v1753 = vsub.f32 %v1559, %v1625
    %v1754 = vsub.f32 %v1560, %v1626
    %v1755 = vsub.f32 %v1561, %v1627
    %v1756 = vsub.f32 %v1562, %v1628
    %v1757 = vsub.f32 %v1563, %v1629
    %v1758 = vsub.f32 %v1564, %v1630
    %v1759 = vsub.f32 %v1565, %v1631
    %v1760 = vsub.f32 %v1566, %v1632
    %v1761 = vsub.f32 %v1567, %v1633
    %v1762 = vsub.f32 %v1568, %v1634
    %v1763 = vadd.f32 %v1731, 1e-05
    %v1764 = vadd.f32 %v1732, 1e-05
    %v1765 = vadd.f32 %v1733, 1e-05
    %v1766 = vadd.f32 %v1734, 1e-05
    %v1767 = vadd.f32 %v1735, 1e-05
    %v1768 = vadd.f32 %v1736, 1e-05
    %v1769 = vadd.f32 %v1737, 1e-05
    %v1770 = vadd.f32 %v1738, 1e-05
    %v1771 = vadd.f32 %v1739, 1e-05
    %v1772 = vadd.f32 %v1740, 1e-05
    %v1773 = vadd.f32 %v1741, 1e-05
    %v1774 = vadd.f32 %v1742, 1e-05
    %v1775 = vadd.f32 %v1743, 1e-05
    %v1776 = vadd.f32 %v1744, 1e-05
    %v1777 = vadd.f32 %v1745, 1e-05
    %v1778 = vadd.f32 %v1746, 1e-05
    %v1779 = vrsqrt.pop %v1763
    %v1780 = vmul.f32 %v1779, %v1763
    %v1781 = vmul.f32 %v1780, %v1779
    %v1782 = vmul.f32 0.5, %v1781
    %v1783 = vsub.f32 1.5, %v1782
    %v1784 = vmul.f32 %v1779, %v1783
    %vm1785 = vweird.f32 %v1763
    %vm1786 = vweird.f32 %v1779
    %vm1787 = vmor %vm1785, %vm1786
    %v1788 = vsel %vm1787, %v1779, %v1784
    %v1789 = vrsqrt.pop %v1764
    %v1790 = vmul.f32 %v1789, %v1764
    %v1791 = vmul.f32 %v1790, %v1789
    %v1792 = vmul.f32 0.5, %v1791
    %v1793 = vsub.f32 1.5, %v1792
    %v1794 = vmul.f32 %v1789, %v1793
    %vm1795 = vweird.f32 %v1764
    %vm1796 = vweird.f32 %v1789
    %vm1797 = vmor %vm1795, %vm1796
    %v1798 = vsel %vm1797, %v1789, %v1794
    %v1799 = vrsqrt.pop %v1765
    %v1800 = vmul.f32 %v1799, %v1765
    %v1801 = vmul.f32 %v1800, %v1799
    %v1802 = vmul.f32 0.5, %v1801
    %v1803 = vsub.f32 1.5, %v1802
    %v1804 = vmul.f32 %v1799, %v1803
    %vm1805 = vweird.f32 %v1765
    %vm1806 = vweird.f32 %v1799
    %vm1807 = vmor %vm1805, %vm1806
    %v1808 = vsel %vm1807, %v1799, %v1804
    %v1809 = vrsqrt.pop %v1766
    %v1810 = vmul.f32 %v1809, %v1766
    %v1811 = vmul.f32 %v1810, %v1809
    %v1812 = vmul.f32 0.5, %v1811
    %v1813 = vsub.f32 1.5, %v1812
    %v1814 = vmul.f32 %v1809, %v1813
    %vm1815 = vweird.f32 %v1766
    %vm1816 = vweird.f32 %v1809
    %vm1817 = vmor %vm1815, %vm1816
    %v1818 = vsel %vm1817, %v1809, %v1814
    %v1819 = vrsqrt.pop %v1767
    %v1820 = vmul.f32 %v1819, %v1767
    %v1821 = vmul.f32 %v1820, %v1819
    %v1822 = vmul.f32 0.5, %v1821
    %v1823 = vsub.f32 1.5, %v1822
    %v1824 = vmul.f32 %v1819, %v1823
    %vm1825 = vweird.f32 %v1767
    %vm1826 = vweird.f32 %v1819
    %vm1827 = vmor %vm1825, %vm1826
    %v1828 = vsel %vm1827, %v1819, %v1824
    %v1829 = vrsqrt.pop %v1768
    %v1830 = vmul.f32 %v1829, %v1768
    %v1831 = vmul.f32 %v1830, %v1829
    %v1832 = vmul.f32 0.5, %v1831
    %v1833 = vsub.f32 1.5, %v1832
    %v1834 = vmul.f32 %v1829, %v1833
    %vm1835 = vweird.f32 %v1768
    %vm1836 = vweird.f32 %v1829
    %vm1837 = vmor %vm1835, %vm1836
    %v1838 = vsel %vm1837, %v1829, %v1834
    %v1839 = vrsqrt.pop %v1769
    %v1840 = vmul.f32 %v1839, %v1769
    %v1841 = vmul.f32 %v1840, %v1839
    %v1842 = vmul.f32 0.5, %v1841
    %v1843 = vsub.f32 1.5, %v1842
    %v1844 = vmul.f32 %v1839, %v1843
    %vm1845 = vweird.f32 %v1769
    %vm1846 = vweird.f32 %v1839
    %vm1847 = vmor %vm1845, %vm1846
    %v1848 = vsel %vm1847, %v1839, %v1844
    %v1849 = vrsqrt.pop %v1770
    %v1850 = vmul.f32 %v1849, %v1770
    %v1851 = vmul.f32 %v1850, %v1849
    %v1852 = vmul.f32 0.5, %v1851
    %v1853 = vsub.f32 1.5, %v1852
    %v1854 = vmul.f32 %v1849, %v1853
    %vm1855 = vweird.f32 %v1770
    %vm1856 = vweird.f32 %v1849
    %vm1857 = vmor %vm1855, %vm1856
    %v1858 = vsel %vm1857, %v1849, %v1854
    %v1859 = vrsqrt.pop %v1771
    %v1860 = vmul.f32 %v1859, %v1771
    %v1861 = vmul.f32 %v1860, %v1859
    %v1862 = vmul.f32 0.5, %v1861
    %v1863 = vsub.f32 1.5, %v1862
    %v1864 = vmul.f32 %v1859, %v1863
    %vm1865 = vweird.f32 %v1771
    %vm1866 = vweird.f32 %v1859
    %vm1867 = vmor %vm1865, %vm1866
    %v1868 = vsel %vm1867, %v1859, %v1864
    %v1869 = vrsqrt.pop %v1772
    %v1870 = vmul.f32 %v1869, %v1772
    %v1871 = vmul.f32 %v1870, %v1869
    %v1872 = vmul.f32 0.5, %v1871
    %v1873 = vsub.f32 1.5, %v1872
    %v1874 = vmul.f32 %v1869, %v1873
    %vm1875 = vweird.f32 %v1772
    %vm1876 = vweird.f32 %v1869
    %vm1877 = vmor %vm1875, %vm1876
    %v1878 = vsel %vm1877, %v1869, %v1874
    %v1879 = vrsqrt.pop %v1773
    %v1880 = vmul.f32 %v1879, %v1773
    %v1881 = vmul.f32 %v1880, %v1879
    %v1882 = vmul.f32 0.5, %v1881
    %v1883 = vsub.f32 1.5, %v1882
    %v1884 = vmul.f32 %v1879, %v1883
    %vm1885 = vweird.f32 %v1773
    %vm1886 = vweird.f32 %v1879
    %vm1887 = vmor %vm1885, %vm1886
    %v1888 = vsel %vm1887, %v1879, %v1884
    %v1889 = vrsqrt.pop %v1774
    %v1890 = vmul.f32 %v1889, %v1774
    %v1891 = vmul.f32 %v1890, %v1889
    %v1892 = vmul.f32 0.5, %v1891
    %v1893 = vsub.f32 1.5, %v1892
    %v1894 = vmul.f32 %v1889, %v1893
    %vm1895 = vweird.f32 %v1774
    %vm1896 = vweird.f32 %v1889
    %vm1897 = vmor %vm1895, %vm1896
    %v1898 = vsel %vm1897, %v1889, %v1894
    %v1899 = vrsqrt.pop %v1775
    %v1900 = vmul.f32 %v1899, %v1775
    %v1901 = vmul.f32 %v1900, %v1899
    %v1902 = vmul.f32 0.5, %v1901
    %v1903 = vsub.f32 1.5, %v1902
    %v1904 = vmul.f32 %v1899, %v1903
    %vm1905 = vweird.f32 %v1775
    %vm1906 = vweird.f32 %v1899
    %vm1907 = vmor %vm1905, %vm1906
    %v1908 = vsel %vm1907, %v1899, %v1904
    %v1909 = vrsqrt.pop %v1776
    %v1910 = vmul.f32 %v1909, %v1776
    %v1911 = vmul.f32 %v1910, %v1909
    %v1912 = vmul.f32 0.5, %v1911
    %v1913 = vsub.f32 1.5, %v1912
    %v1914 = vmul.f32 %v1909, %v1913
    %vm1915 = vweird.f32 %v1776
    %vm1916 = vweird.f32 %v1909
    %vm1917 = vmor %vm1915, %vm1916
    %v1918 = vsel %vm1917, %v1909, %v1914
    %v1919 = vrsqrt.pop %v1777
    %v1920 = vmul.f32 %v1919, %v1777
    %v1921 = vmul.f32 %v1920, %v1919
    %v1922 = vmul.f32 0.5, %v1921
    %v1923 = vsub.f32 1.5, %v1922
    %v1924 = vmul.f32 %v1919, %v1923
    %vm1925 = vweird.f32 %v1777
    %vm1926 = vweird.f32 %v1919
    %vm1927 = vmor %vm1925, %vm1926
    %v1928 = vsel %vm1927, %v1919, %v1924
    %v1929 = vrsqrt.pop %v1778
    %v1930 = vmul.f32 %v1929, %v1778
    %v1931 = vmul.f32 %v1930, %v1929
    %v1932 = vmul.f32 0.5, %v1931
    %v1933 = vsub.f32 1.5, %v1932
    %v1934 = vmul.f32 %v1929, %v1933
    %vm1935 = vweird.f32 %v1778
    %vm1936 = vweird.f32 %v1929
    %vm1937 = vmor %vm1935, %vm1936
    %v1938 = vsel %vm1937, %v1929, %v1934
    %v1939 = vmul.f32 %v1747, %v1788
    %v1940 = vmul.f32 %v1748, %v1798
    %v1941 = vmul.f32 %v1749, %v1808
    %v1942 = vmul.f32 %v1750, %v1818
    %v1943 = vmul.f32 %v1751, %v1828
    %v1944 = vmul.f32 %v1752, %v1838
    %v1945 = vmul.f32 %v1753, %v1848
    %v1946 = vmul.f32 %v1754, %v1858
    %v1947 = vmul.f32 %v1755, %v1868
    %v1948 = vmul.f32 %v1756, %v1878
    %v1949 = vmul.f32 %v1757, %v1888
    %v1950 = vmul.f32 %v1758, %v1898
    %v1951 = vmul.f32 %v1759, %v1908
    %v1952 = vmul.f32 %v1760, %v1918
    %v1953 = vmul.f32 %v1761, %v1928
    %v1954 = vmul.f32 %v1762, %v1938
    %v1955 = vperm.slane %v1569, 0
    %v1956 = vmul.f32 %v1939, %v1955
    %v1957 = vmul.f32 %v1940, %v1955
    %v1958 = vmul.f32 %v1941, %v1955
    %v1959 = vmul.f32 %v1942, %v1955
    %v1960 = vmul.f32 %v1943, %v1955
    %v1961 = vmul.f32 %v1944, %v1955
    %v1962 = vmul.f32 %v1945, %v1955
    %v1963 = vmul.f32 %v1946, %v1955
    %v1964 = vmul.f32 %v1947, %v1955
    %v1965 = vmul.f32 %v1948, %v1955
    %v1966 = vmul.f32 %v1949, %v1955
    %v1967 = vmul.f32 %v1950, %v1955
    %v1968 = vmul.f32 %v1951, %v1955
    %v1969 = vmul.f32 %v1952, %v1955
    %v1970 = vmul.f32 %v1953, %v1955
    %v1971 = vmul.f32 %v1954, %v1955
    %v1972 = vperm.slane %v1570, 0
    %v1973 = vadd.f32 %v1956, %v1972
    %v1974 = vadd.f32 %v1957, %v1972
    %v1975 = vadd.f32 %v1958, %v1972
    %v1976 = vadd.f32 %v1959, %v1972
    %v1977 = vadd.f32 %v1960, %v1972
    %v1978 = vadd.f32 %v1961, %v1972
    %v1979 = vadd.f32 %v1962, %v1972
    %v1980 = vadd.f32 %v1963, %v1972
    %v1981 = vadd.f32 %v1964, %v1972
    %v1982 = vadd.f32 %v1965, %v1972
    %v1983 = vadd.f32 %v1966, %v1972
    %v1984 = vadd.f32 %v1967, %v1972
    %v1985 = vadd.f32 %v1968, %v1972
    %v1986 = vadd.f32 %v1969, %v1972
    %v1987 = vadd.f32 %v1970, %v1972
    %v1988 = vadd.f32 %v1971, %v1972
    %v1989 = vld [vmem:[#allocation2 + $0x28] sm:$0xff]
    %v1990 = vld [vmem:[#allocation2 + $0x58] sm:$0xff]
    %v1991 = vld [vmem:[#allocation2 + $0x88] sm:$0xff]
    %v1992 = vld [vmem:[#allocation2 + $0xb8] sm:$0xff]
    %v1993 = vld [vmem:[%s2 + $0x8] sm:$0x1]
    %v1994 = vperm.slane %v1993, 0
    %v1996 = vsel %vm54, %v1973, 0
    %v1999 = vsel %vm54, %v1974, 0
    %v2002 = vsel %vm54, %v1975, 0
    %v2005 = vsel %vm54, %v1976, 0
    %v2008 = vsel %vm54, %v1977, 0
    %v2011 = vsel %vm54, %v1978, 0
    %v2014 = vsel %vm54, %v1979, 0
    %v2017 = vsel %vm54, %v1980, 0
    %v2020 = vsel %vm54, %v1981, 0
    %v2023 = vsel %vm54, %v1982, 0
    %v2026 = vsel %vm54, %v1983, 0
    %v2029 = vsel %vm54, %v1984, 0
    %v2032 = vsel %vm54, %v1985, 0
    %v2035 = vsel %vm54, %v1986, 0
    %v2038 = vsel %vm54, %v1987, 0
    %v2041 = vsel %vm54, %v1988, 0
    %2043 = vmatpush.msra.mxu0 0.0
    %2044 = vmatpush.msra.mxu0 0.0
    %2045 = vmatpush.msra.mxu0 0.0
    %2046 = vmatpush.msra.mxu0 0.0
    %2047 = vmatpush.msra.mxu0 0.0
    %2048 = vmatpush.msra.mxu0 0.0
    %2049 = vmatpush.msra.mxu0 0.0
    %2050 = vmatpush.msra.mxu0 0.0
    %2051 = vmatpush.msra.mxu0 0.0
    %2052 = vmatpush.msra.mxu0 0.0
    %2053 = vmatpush.msra.mxu0 0.0
    %2054 = vmatpush.msra.mxu0 0.0
    %2055 = vmatpush.msra.mxu0 %v1992
    %2056 = vmatpush.msra.mxu0 %v1991
    %2057 = vmatpush.msra.mxu0 %v1990
    %2058 = vmatpush.msra.mxu0 %v1989
    %2059 = vmatmul.f32.gmra.mxu0 %v1996
    %v2060 = vpop.f32.mrf.mxu0
    %v2061 = vadd.f32 %v1994, %v2060
    %2062 = vmatmul.f32.gmra.mxu0 %v1999
    %v2063 = vpop.f32.mrf.mxu0
    %v2064 = vadd.f32 %v1994, %v2063
    %2065 = vmatmul.f32.gmra.mxu0 %v2002
    %v2066 = vpop.f32.mrf.mxu0
    %v2067 = vadd.f32 %v1994, %v2066
    %2068 = vmatmul.f32.gmra.mxu0 %v2005
    %v2069 = vpop.f32.mrf.mxu0
    %v2070 = vadd.f32 %v1994, %v2069
    %2071 = vmatmul.f32.gmra.mxu0 %v2008
    %v2072 = vpop.f32.mrf.mxu0
    %v2073 = vadd.f32 %v1994, %v2072
    %2074 = vmatmul.f32.gmra.mxu0 %v2011
    %v2075 = vpop.f32.mrf.mxu0
    %v2076 = vadd.f32 %v1994, %v2075
    %2077 = vmatmul.f32.gmra.mxu0 %v2014
    %v2078 = vpop.f32.mrf.mxu0
    %v2079 = vadd.f32 %v1994, %v2078
    %2080 = vmatmul.f32.gmra.mxu0 %v2017
    %v2081 = vpop.f32.mrf.mxu0
    %v2082 = vadd.f32 %v1994, %v2081
    %2083 = vmatmul.f32.gmra.mxu0 %v2020
    %v2084 = vpop.f32.mrf.mxu0
    %v2085 = vadd.f32 %v1994, %v2084
    %2086 = vmatmul.f32.gmra.mxu0 %v2023
    %v2087 = vpop.f32.mrf.mxu0
    %v2088 = vadd.f32 %v1994, %v2087
    %2089 = vmatmul.f32.gmra.mxu0 %v2026
    %v2090 = vpop.f32.mrf.mxu0
    %v2091 = vadd.f32 %v1994, %v2090
    %2092 = vmatmul.f32.gmra.mxu0 %v2029
    %v2093 = vpop.f32.mrf.mxu0
    %v2094 = vadd.f32 %v1994, %v2093
    %2095 = vmatmul.f32.gmra.mxu0 %v2032
    %v2096 = vpop.f32.mrf.mxu0
    %v2097 = vadd.f32 %v1994, %v2096
    %2098 = vmatmul.f32.gmra.mxu0 %v2035
    %v2099 = vpop.f32.mrf.mxu0
    %v2100 = vadd.f32 %v1994, %v2099
    %2101 = vmatmul.f32.gmra.mxu0 %v2038
    %v2102 = vpop.f32.mrf.mxu0
    %v2103 = vadd.f32 %v1994, %v2102
    %2104 = vmatmul.f32.gmra.mxu0 %v2041
    %v2105 = vpop.f32.mrf.mxu0
    %v2106 = vadd.f32 %v1994, %v2105
    %2107 = vdwg.mxu0
    %2108 = vst [vmem:[#allocation5] sm:$0xff] %v2061
    %2109 = vst [vmem:[#allocation5 + $0x8] sm:$0xff] %v2064
    %2110 = vst [vmem:[#allocation5 + $0x10] sm:$0xff] %v2067
    %2111 = vst [vmem:[#allocation5 + $0x18] sm:$0xff] %v2070
    %2112 = vst [vmem:[#allocation5 + $0x20] sm:$0xff] %v2073
    %2113 = vst [vmem:[#allocation5 + $0x28] sm:$0xff] %v2076
    %2114 = vst [vmem:[#allocation5 + $0x30] sm:$0xff] %v2079
    %2115 = vst [vmem:[#allocation5 + $0x38] sm:$0xff] %v2082
    %2116 = vst [vmem:[#allocation5 + $0x40] sm:$0xff] %v2085
    %2117 = vst [vmem:[#allocation5 + $0x48] sm:$0xff] %v2088
    %2118 = vst [vmem:[#allocation5 + $0x50] sm:$0xff] %v2091
    %2119 = vst [vmem:[#allocation5 + $0x58] sm:$0xff] %v2094
    %2120 = vst [vmem:[#allocation5 + $0x60] sm:$0xff] %v2097
    %2121 = vst [vmem:[#allocation5 + $0x68] sm:$0xff] %v2100
    %2122 = vst [vmem:[#allocation5 + $0x70] sm:$0xff] %v2103
    %2123 = vst [vmem:[#allocation5 + $0x78] sm:$0xff] %v2106
    // Predicated region
    $region22: #{tpu_custom_call.1} parent=1 // pred_check
      _
    $region23: #{tpu_custom_call.1} parent=1 // pred_check_branch
      %2125 = sbr.rel (0) target = $region25
    $region24: #{tpu_custom_call.1} parent=1 // pred_region
      %2127 = vsyncadd [#allocation4], 0
      %s2128 = sshll.u32 [#allocation5], 4
      %s2129 = int_to_ptr.vmem [resolvable:$true] %s2128
      %s2130 = sshll.u32 %s4, 4
      %s2131 = int_to_ptr.hbm [resolvable:$true] %s2130
      %2136 = dma.vmem_to_hbm [thread:$0]  %s2129, 2048, %s2131, [#allocation4], 128, 128, 8
    $region25: #{tpu_custom_call.1} parent=1 // pred_fallthru
      _
    // Predicated region
    $region26: #{tpu_custom_call.1} parent=1 // pred_check
      _
    $region27: #{tpu_custom_call.1} parent=1 // pred_check_branch
      %2138 = sbr.rel (0) target = $region29
    $region28: #{tpu_custom_call.1} parent=1 // pred_region
      %2140 = dma.done [#allocation4], 2048
    $region29: #{tpu_custom_call.1} parent=1 // pred_fallthru
      _
    %2141 = vsyncpa [#allocation3], 1
    %2142 = vsyncpa [#allocation4], 1

</llo_original>
